<compile_context>
chip_gen: v7x
topology: tpu7x:2x2x1
jax: 0.10.0
libtpu: 0.0.40
codegen_flags: <defaults>
</compile_context>

<pallas_src>
import jax
import jax.numpy as jnp
from jax.experimental import pallas as pl
from jax.experimental.pallas import tpu as pltpu

_LEAKY_SLOPE = 0.01           # torch.nn.LeakyReLU default
_BN_EPS = 1e-5                # torch.nn.BatchNorm1d default


def _leaky_relu(x):
    return jnp.where(x > 0, x, _LEAKY_SLOPE * x)


def _pad16(n):
    return ((n + 15) // 16) * 16


def sage_dsp_kernel(x_ref, a_ref, p_ref, wh_ref, bh_ref, wo_ref, bo_ref, out_ref):
    f32 = jnp.float32
    bf16 = jnp.bfloat16

    in_pad = x_ref.shape[1]
    hidden = bh_ref.shape[1]
    out_ch = bo_ref.shape[1]

    # --- static, 16-row-aligned slices of the packed bf16 weight slabs ---
    r = 0
    w_pre = wh_ref[r:r + in_pad, :];  r += in_pad
    w_l1  = wh_ref[r:r + hidden, :];  r += hidden   # conv1 lin_l
    w_r1  = wh_ref[r:r + hidden, :];  r += hidden   # conv1 lin_r
    w_hh1 = wh_ref[r:r + hidden, :];  r += hidden
    w_l2  = wh_ref[r:r + hidden, :];  r += hidden   # conv2 lin_l
    w_r2  = wh_ref[r:r + hidden, :];  r += hidden   # conv2 lin_r
    w_hh2 = wh_ref[r:r + hidden, :];  r += hidden
    w_oh  = wh_ref[r:r + out_ch, :]                 # lin_oh with BN folded in

    w_l3 = wo_ref[0:hidden, :]                      # conv3 lin_l
    w_r3 = wo_ref[hidden:2 * hidden, :]             # conv3 lin_r
    w_oo = wo_ref[2 * hidden:2 * hidden + out_ch, :]

    b_pre = bh_ref[0:1, :]
    b_c1  = bh_ref[1:2, :]
    b_hh1 = bh_ref[2:3, :]
    b_c2  = bh_ref[3:4, :]
    b_hh2 = bh_ref[4:5, :]
    b_oh  = bh_ref[5:6, :]                          # BN folded in
    w_h1  = bh_ref[6:7, :]                          # lin_h1 weight stored as a row
    b_h1  = bh_ref[7:8, 0:1]                        # lin_h1 bias (scalar)

    b_c3 = bo_ref[0:1, :]
    b_oo = bo_ref[1:2, :]

    a = a_ref[...]    # [N, N] row-normalized adjacency, bf16
    p = p_ref[...]    # [G, N] mean-pooling matrix, bf16

    def lin(v_f32, w_bf16, b_f32):
        # bf16 x bf16 on the MXU with f32 accumulation; bias add stays f32 (VPU)
        return jnp.dot(v_f32.astype(bf16), w_bf16,
                       preferred_element_type=f32) + b_f32

    def sage_conv(h_f32, w_l, w_r, b_l):
        # SAGEConv (aggr='mean'): lin_l(mean_agg(h)) + lin_r(h)
        h_bf = h_f32.astype(bf16)                                     # reused twice
        agg = jnp.dot(a, h_bf, preferred_element_type=f32)            # mean aggregation
        y = jnp.dot(agg.astype(bf16), w_l, preferred_element_type=f32)
        y = y + jnp.dot(h_bf, w_r, preferred_element_type=f32)
        return y + b_l

    # prelin (x is already bf16, zero-padded to in_pad columns)
    h = jnp.dot(x_ref[...], w_pre, preferred_element_type=f32) + b_pre

    # conv1 -> relu -> lin_hh1 -> (dropout=identity in eval) -> leaky relu
    h = _leaky_relu(lin(jnp.maximum(sage_conv(h, w_l1, w_r1, b_c1), 0.0), w_hh1, b_hh1))
    # conv2 -> relu -> lin_hh2 -> leaky relu
    h = _leaky_relu(lin(jnp.maximum(sage_conv(h, w_l2, w_r2, b_c2), 0.0), w_hh2, b_hh2))
    # conv3 -> relu -> lin_oo -> leaky relu
    h = _leaky_relu(lin(jnp.maximum(sage_conv(h, w_l3, w_r3, b_c3), 0.0), w_oo, b_oo))

    # global_mean_pool -> [G, out_channels]
    g = jnp.dot(p, h.astype(bf16), preferred_element_type=f32)

    # lin_oh with eval-mode BatchNorm folded into weight/bias, then leaky relu
    g = _leaky_relu(lin(g, w_oh, b_oh))

    # lin_h1 ([H,1] weight as a row -> VPU mul + lane reduce) + final relu
    g = jnp.sum(g * w_h1, axis=1, keepdims=True) + b_h1
    out_ref[...] = jnp.maximum(g, 0.0)


def _pack_params(params, in_channels):
    """Pack the 25 module parameters into 4 slabs (bf16 weights, f32 biases)."""
    (w_pre, b_pre,
     wl1, bl1, wr1,
     whh1, bhh1,
     wl2, bl2, wr2,
     whh2, bhh2,
     wl3, bl3, wr3,
     woo, boo,
     woh, boh,
     gamma, beta, run_mean, run_var,
     wh1, bh1) = params

    f32 = jnp.float32
    bf16 = jnp.bfloat16
    hidden = w_pre.shape[1]
    out_ch = woo.shape[1]
    in_pad = _pad16(in_channels)

    # Static-slice alignment requires 16-row-aligned slab pieces for bf16.
    assert hidden % 16 == 0 and out_ch % 16 == 0, (
        "hidden_channels and out_channels must be multiples of 16 for the "
        "packed bf16 slab layout")

    # eval-mode BatchNorm1d folded into lin_oh (generic over running stats)
    bn_scale = gamma / jnp.sqrt(run_var + _BN_EPS)          # [1, hidden]
    woh_f = woh * bn_scale                                  # [out_ch, hidden]
    boh_f = (boh - run_mean) * bn_scale + beta              # [1, hidden]

    # pad prelin to a 16-aligned fan-in so every slab slice is tile-aligned
    w_pre_p = jnp.zeros((in_pad, hidden), f32).at[:in_channels, :].set(w_pre)

    # packed slabs
    w_h = jnp.concatenate(
        [w_pre_p, wl1, wr1, whh1, wl2, wr2, whh2, woh_f], axis=0).astype(bf16)
    b_h = jnp.concatenate(
        [b_pre, bl1, bhh1, bl2, bhh2, boh_f,
         wh1.reshape(1, hidden),
         jnp.zeros((1, hidden), f32).at[0, 0].set(bh1.reshape(()))],
        axis=0)                                             # [8, hidden] f32
    w_o = jnp.concatenate([wl3, wr3, woo], axis=0).astype(bf16)  # [2H+out_ch, out_ch]
    b_o = jnp.concatenate([bl3, boo], axis=0)               # [2, out_ch] f32
    return w_h, b_h, w_o, b_o, in_pad


def _build_dense_operands(x, edge_index, batch, num_graphs, in_pad):
    """Dense mean-aggregation / mean-pooling matrices for one mini-batch (glue)."""
    f32 = jnp.float32
    bf16 = jnp.bfloat16
    n, in_ch = x.shape

    src, dst = edge_index[0], edge_index[1]
    adj = jnp.zeros((n, n), f32).at[dst, src].add(1.0)
    deg = adj.sum(axis=1, keepdims=True)
    adj = (adj / jnp.maximum(deg, 1.0)).astype(bf16)

    counts = jnp.zeros((num_graphs,), f32).at[batch].add(1.0)
    pool = (jax.nn.one_hot(batch, num_graphs, dtype=f32).T
            / jnp.maximum(counts, 1.0)[:, None]).astype(bf16)

    x_p = jnp.zeros((n, in_pad), f32).at[:, :in_ch].set(x.astype(f32)).astype(bf16)
    return x_p, adj, pool


def sage_dsp_forward_batched(x_b, adj_b, pool_b, w_h, b_h, w_o, b_o):
    """Run the kernel over B stacked mini-batches along a parallel grid axis."""
    B, n, in_pad = x_b.shape
    num_graphs = pool_b.shape[1]
    hidden = b_h.shape[1]
    out_ch = b_o.shape[1]

    # --- advisory cost estimate ---
    flops_per = (3 * 2 * n * n * hidden                  # A@h (conv1..3)
                 + 2 * num_graphs * n * out_ch           # P@h
                 + 2 * n * in_pad * hidden               # prelin
                 + 2 * (2 * 2 * n * hidden * hidden)     # conv1/2 lin_l+lin_r
                 + 2 * 2 * n * hidden * out_ch           # conv3 lin_l+lin_r
                 + 2 * (2 * n * hidden * hidden)         # lin_hh1/2
                 + 2 * n * out_ch * out_ch               # lin_oo
                 + 2 * num_graphs * out_ch * hidden      # lin_oh
                 + 2 * num_graphs * hidden)              # lin_h1
    in_bytes_per = (x_b.dtype.itemsize * n * in_pad
                    + adj_b.dtype.itemsize * n * n
                    + pool_b.dtype.itemsize * num_graphs * n)
    slab_bytes = sum(int(a.size) * a.dtype.itemsize for a in (w_h, b_h, w_o, b_o))
    cost = pl.CostEstimate(
        flops=int(B * flops_per),
        transcendentals=0,
        bytes_accessed=int(B * (in_bytes_per + 4 * num_graphs) + slab_bytes))

    # double-buffered per-step inputs + resident slabs + activation headroom
    vmem_need = 2 * in_bytes_per + slab_bytes + (8 << 20)
    vmem_limit = int(min(max(vmem_need, 32 << 20), 100 << 20))

    const = lambda rows, cols: pl.BlockSpec((rows, cols), lambda b: (0, 0))
    return pl.pallas_call(
        sage_dsp_kernel,
        out_shape=jax.ShapeDtypeStruct((B, num_graphs, 1), jnp.float32),
        grid=(B,),
        in_specs=[
            pl.BlockSpec((None, n, in_pad), lambda b: (b, 0, 0)),
            pl.BlockSpec((None, n, n), lambda b: (b, 0, 0)),
            pl.BlockSpec((None, num_graphs, n), lambda b: (b, 0, 0)),
            const(w_h.shape[0], hidden),
            const(8, hidden),
            const(w_o.shape[0], out_ch),
            const(2, out_ch),
        ],
        out_specs=pl.BlockSpec((None, num_graphs, 1), lambda b: (b, 0, 0)),
        compiler_params=pltpu.CompilerParams(
            dimension_semantics=("parallel",),
            vmem_limit_bytes=vmem_limit),
        cost_estimate=cost,
    )(x_b, adj_b, pool_b, w_h, b_h, w_o, b_o)


def sage_dsp_forward(x, edge_index, batch, params, num_graphs):
    """Single mini-batch convenience wrapper (B = 1)."""
    w_h, b_h, w_o, b_o, in_pad = _pack_params(params, x.shape[1])
    x_p, adj, pool = _build_dense_operands(x, edge_index, batch, num_graphs, in_pad)
    out = sage_dsp_forward_batched(x_p[None], adj[None], pool[None],
                                   w_h, b_h, w_o, b_o)
    return out[0]


def make_params(key, in_channels, hidden_channels, out_channels):
    """Deterministic parameter init (PyTorch Linear-style uniform)."""
    def dense(k, fan_in, fan_out, bias=True):
        k1, k2 = jax.random.split(k)
        bound = 1.0 / float(fan_in) ** 0.5
        w = jax.random.uniform(k1, (fan_in, fan_out), jnp.float32, -bound, bound)
        if bias:
            b = jax.random.uniform(k2, (1, fan_out), jnp.float32, -bound, bound)
            return [w, b]
        return [w]

    keys = jax.random.split(key, 12)
    p = []
    p += dense(keys[0], in_channels, hidden_channels)                 # prelin  (W, b)
    p += dense(keys[1], hidden_channels, hidden_channels)             # conv1 lin_l (W, b)
    p += dense(keys[2], hidden_channels, hidden_channels, bias=False) # conv1 lin_r (W)
    p += dense(keys[3], hidden_channels, hidden_channels)             # lin_hh1
    p += dense(keys[4], hidden_channels, hidden_channels)             # conv2 lin_l
    p += dense(keys[5], hidden_channels, hidden_channels, bias=False) # conv2 lin_r
    p += dense(keys[6], hidden_channels, hidden_channels)             # lin_hh2
    p += dense(keys[7], hidden_channels, out_channels)                # conv3 lin_l
    p += dense(keys[8], hidden_channels, out_channels, bias=False)    # conv3 lin_r
    p += dense(keys[9], out_channels, out_channels)                   # lin_oo
    p += dense(keys[10], out_channels, hidden_channels)               # lin_oh
    p += [jnp.ones((1, hidden_channels), jnp.float32),                # norm_h gamma
          jnp.zeros((1, hidden_channels), jnp.float32),               # norm_h beta
          jnp.zeros((1, hidden_channels), jnp.float32),               # running_mean
          jnp.ones((1, hidden_channels), jnp.float32)]                # running_var
    p += dense(keys[11], hidden_channels, 1)                          # lin_h1
    return p


if __name__ == "__main__":
    key = jax.random.PRNGKey(0)
    in_channels, hidden_channels, out_channels = 6, 32, 16
    num_nodes, num_graphs, num_edges = 16, 2, 40
    num_minibatches = 2

    kp, kd = jax.random.split(key)
    params = make_params(kp, in_channels, hidden_channels, out_channels)
    w_h, b_h, w_o, b_o, in_pad = _pack_params(params, in_channels)

    batch = jnp.array([0] * 8 + [1] * 8, dtype=jnp.int32)

    xs, adjs, pools = [], [], []
    x0 = e0 = None
    for i in range(num_minibatches):
        kx, ke, kd = jax.random.split(kd, 3)
        x = jax.random.normal(kx, (num_nodes, in_channels), jnp.float32)
        edge_index = jax.random.randint(
            ke, (2, num_edges), 0, num_nodes, dtype=jnp.int32)
        if i == 0:
            x0, e0 = x, edge_index
        x_p, adj, pool = _build_dense_operands(x, edge_index, batch, num_graphs, in_pad)
        xs.append(x_p); adjs.append(adj); pools.append(pool)

    # batched path: grid axis over mini-batches
    out_b = sage_dsp_forward_batched(
        jnp.stack(xs), jnp.stack(adjs), jnp.stack(pools), w_h, b_h, w_o, b_o)
    # single mini-batch convenience path
    out_0 = sage_dsp_forward(x0, e0, batch, params, num_graphs)

    jax.block_until_ready((out_b, out_0))
    assert out_b.shape == (num_minibatches, num_graphs, 1)
    assert out_0.shape == (num_graphs, 1)
    assert bool(jnp.all(jnp.isfinite(out_b)))
    assert bool(jnp.allclose(out_b[0], out_0, atol=1e-4))
    print("KERNEL_OK")
</pallas_src>

<mosaic_0001>
module attributes {stable_mosaic.version = 11 : i64} {
  func.func @sage_dsp_kernel(%arg0: i32, %arg1: memref<1x16x16xbf16, #tpu.memory_space<vmem>>, %arg2: memref<1x16x16xbf16, #tpu.memory_space<vmem>>, %arg3: memref<1x2x16xbf16, #tpu.memory_space<vmem>>, %arg4: memref<224x32xbf16, #tpu.memory_space<vmem>>, %arg5: memref<8x32xf32, #tpu.memory_space<vmem>>, %arg6: memref<80x16xbf16, #tpu.memory_space<vmem>>, %arg7: memref<2x16xf32, #tpu.memory_space<vmem>>, %arg8: memref<1x2x1xf32, #tpu.memory_space<vmem>>) attributes {dimension_semantics = [#tpu.dimension_semantics<parallel>], iteration_bounds = array<i64: 2>, scalar_prefetch = 0 : i64, scratch_operands = 0 : i64, tpu.core_type = #tpu.core_type<tc>, window_params = [{transform_indices = @transform_0, window_bounds = array<i64: 1, 16, 16>}, {transform_indices = @transform_1, window_bounds = array<i64: 1, 16, 16>}, {transform_indices = @transform_2, window_bounds = array<i64: 1, 2, 16>}, {pipeline_mode = #tpu.pipeline_mode<synchronous>, transform_indices = @transform_3, window_bounds = array<i64: 224, 32>}, {pipeline_mode = #tpu.pipeline_mode<synchronous>, transform_indices = @transform_4, window_bounds = array<i64: 8, 32>}, {pipeline_mode = #tpu.pipeline_mode<synchronous>, transform_indices = @transform_5, window_bounds = array<i64: 80, 16>}, {pipeline_mode = #tpu.pipeline_mode<synchronous>, transform_indices = @transform_6, window_bounds = array<i64: 2, 16>}, {transform_indices = @transform_7, window_bounds = array<i64: 1, 2, 1>}]} {
    %c0 = arith.constant 0 : index
    %c0_0 = arith.constant 0 : index
    %0 = vector.load %arg4[%c0, %c0_0] : memref<224x32xbf16, #tpu.memory_space<vmem>>, vector<16x32xbf16>
    %c16 = arith.constant 16 : index
    %c0_1 = arith.constant 0 : index
    %1 = vector.load %arg4[%c16, %c0_1] : memref<224x32xbf16, #tpu.memory_space<vmem>>, vector<32x32xbf16>
    %c48 = arith.constant 48 : index
    %c0_2 = arith.constant 0 : index
    %2 = vector.load %arg4[%c48, %c0_2] : memref<224x32xbf16, #tpu.memory_space<vmem>>, vector<32x32xbf16>
    %c80 = arith.constant 80 : index
    %c0_3 = arith.constant 0 : index
    %3 = vector.load %arg4[%c80, %c0_3] : memref<224x32xbf16, #tpu.memory_space<vmem>>, vector<32x32xbf16>
    %c112 = arith.constant 112 : index
    %c0_4 = arith.constant 0 : index
    %4 = vector.load %arg4[%c112, %c0_4] : memref<224x32xbf16, #tpu.memory_space<vmem>>, vector<32x32xbf16>
    %c144 = arith.constant 144 : index
    %c0_5 = arith.constant 0 : index
    %5 = vector.load %arg4[%c144, %c0_5] : memref<224x32xbf16, #tpu.memory_space<vmem>>, vector<32x32xbf16>
    %c176 = arith.constant 176 : index
    %c0_6 = arith.constant 0 : index
    %6 = vector.load %arg4[%c176, %c0_6] : memref<224x32xbf16, #tpu.memory_space<vmem>>, vector<32x32xbf16>
    %c208 = arith.constant 208 : index
    %c0_7 = arith.constant 0 : index
    %7 = vector.load %arg4[%c208, %c0_7] : memref<224x32xbf16, #tpu.memory_space<vmem>>, vector<16x32xbf16>
    %c0_8 = arith.constant 0 : index
    %c0_9 = arith.constant 0 : index
    %8 = vector.load %arg6[%c0_8, %c0_9] : memref<80x16xbf16, #tpu.memory_space<vmem>>, vector<32x16xbf16>
    %c32 = arith.constant 32 : index
    %c0_10 = arith.constant 0 : index
    %9 = vector.load %arg6[%c32, %c0_10] : memref<80x16xbf16, #tpu.memory_space<vmem>>, vector<32x16xbf16>
    %c64 = arith.constant 64 : index
    %c0_11 = arith.constant 0 : index
    %10 = vector.load %arg6[%c64, %c0_11] : memref<80x16xbf16, #tpu.memory_space<vmem>>, vector<16x16xbf16>
    %c0_12 = arith.constant 0 : index
    %c0_13 = arith.constant 0 : index
    %11 = vector.load %arg5[%c0_12, %c0_13] : memref<8x32xf32, #tpu.memory_space<vmem>>, vector<1x32xf32>
    %c1 = arith.constant 1 : index
    %c0_14 = arith.constant 0 : index
    %12 = vector.load %arg5[%c1, %c0_14] : memref<8x32xf32, #tpu.memory_space<vmem>>, vector<1x32xf32>
    %c2 = arith.constant 2 : index
    %c0_15 = arith.constant 0 : index
    %13 = vector.load %arg5[%c2, %c0_15] : memref<8x32xf32, #tpu.memory_space<vmem>>, vector<1x32xf32>
    %c3 = arith.constant 3 : index
    %c0_16 = arith.constant 0 : index
    %14 = vector.load %arg5[%c3, %c0_16] : memref<8x32xf32, #tpu.memory_space<vmem>>, vector<1x32xf32>
    %c4 = arith.constant 4 : index
    %c0_17 = arith.constant 0 : index
    %15 = vector.load %arg5[%c4, %c0_17] : memref<8x32xf32, #tpu.memory_space<vmem>>, vector<1x32xf32>
    %c5 = arith.constant 5 : index
    %c0_18 = arith.constant 0 : index
    %16 = vector.load %arg5[%c5, %c0_18] : memref<8x32xf32, #tpu.memory_space<vmem>>, vector<1x32xf32>
    %c6 = arith.constant 6 : index
    %c0_19 = arith.constant 0 : index
    %17 = vector.load %arg5[%c6, %c0_19] : memref<8x32xf32, #tpu.memory_space<vmem>>, vector<1x32xf32>
    %c7 = arith.constant 7 : index
    %c0_20 = arith.constant 0 : index
    %18 = vector.load %arg5[%c7, %c0_20] : memref<8x32xf32, #tpu.memory_space<vmem>>, vector<1x1xf32>
    %c0_21 = arith.constant 0 : index
    %c0_22 = arith.constant 0 : index
    %19 = vector.load %arg7[%c0_21, %c0_22] : memref<2x16xf32, #tpu.memory_space<vmem>>, vector<1x16xf32>
    %c1_23 = arith.constant 1 : index
    %c0_24 = arith.constant 0 : index
    %20 = vector.load %arg7[%c1_23, %c0_24] : memref<2x16xf32, #tpu.memory_space<vmem>>, vector<1x16xf32>
    %c0_25 = arith.constant 0 : index
    %c0_26 = arith.constant 0 : index
    %c0_27 = arith.constant 0 : index
    %21 = vector.load %arg2[%c0_25, %c0_26, %c0_27] : memref<1x16x16xbf16, #tpu.memory_space<vmem>>, vector<1x16x16xbf16>
    %22 = vector.shape_cast %21 : vector<1x16x16xbf16> to vector<16x16xbf16>
    %c0_28 = arith.constant 0 : index
    %c0_29 = arith.constant 0 : index
    %c0_30 = arith.constant 0 : index
    %23 = vector.load %arg3[%c0_28, %c0_29, %c0_30] : memref<1x2x16xbf16, #tpu.memory_space<vmem>>, vector<1x2x16xbf16>
    %24 = vector.shape_cast %23 : vector<1x2x16xbf16> to vector<2x16xbf16>
    %c0_31 = arith.constant 0 : index
    %c0_32 = arith.constant 0 : index
    %c0_33 = arith.constant 0 : index
    %25 = vector.load %arg1[%c0_31, %c0_32, %c0_33] : memref<1x16x16xbf16, #tpu.memory_space<vmem>>, vector<1x16x16xbf16>
    %26 = vector.shape_cast %25 : vector<1x16x16xbf16> to vector<16x16xbf16>
    %cst = arith.constant dense<0.000000e+00> : vector<16x32xf32>
    %27 = tpu.matmul %26, %0, %cst {dimension_numbers = #tpu.dot_dimension_numbers<[1], [0], [0], [1], [0, 0, 1, 1], [], []>} : vector<16x16xbf16>, vector<16x32xbf16>, vector<16x32xf32> -> vector<16x32xf32>
    %28 = vector.broadcast %11 : vector<1x32xf32> to vector<16x32xf32>
    %29 = arith.addf %27, %28 : vector<16x32xf32>
    %30 = arith.truncf %29 : vector<16x32xf32> to vector<16x32xbf16>
    %cst_34 = arith.constant dense<0.000000e+00> : vector<16x32xf32>
    %31 = tpu.matmul %22, %30, %cst_34 {dimension_numbers = #tpu.dot_dimension_numbers<[1], [0], [0], [1], [0, 0, 1, 1], [], []>} : vector<16x16xbf16>, vector<16x32xbf16>, vector<16x32xf32> -> vector<16x32xf32>
    %32 = arith.truncf %31 : vector<16x32xf32> to vector<16x32xbf16>
    %cst_35 = arith.constant dense<0.000000e+00> : vector<16x32xf32>
    %33 = tpu.matmul %32, %1, %cst_35 {dimension_numbers = #tpu.dot_dimension_numbers<[1], [0], [0], [1], [0, 0, 1, 1], [], []>} : vector<16x32xbf16>, vector<32x32xbf16>, vector<16x32xf32> -> vector<16x32xf32>
    %cst_36 = arith.constant dense<0.000000e+00> : vector<16x32xf32>
    %34 = tpu.matmul %30, %2, %cst_36 {dimension_numbers = #tpu.dot_dimension_numbers<[1], [0], [0], [1], [0, 0, 1, 1], [], []>} : vector<16x32xbf16>, vector<32x32xbf16>, vector<16x32xf32> -> vector<16x32xf32>
    %35 = arith.addf %33, %34 : vector<16x32xf32>
    %36 = vector.broadcast %12 : vector<1x32xf32> to vector<16x32xf32>
    %37 = arith.addf %35, %36 : vector<16x32xf32>
    %cst_37 = arith.constant 0.000000e+00 : f32
    %38 = vector.broadcast %cst_37 : f32 to vector<16x32xf32>
    %39 = arith.maximumf %37, %38 : vector<16x32xf32>
    %40 = arith.truncf %39 : vector<16x32xf32> to vector<16x32xbf16>
    %cst_38 = arith.constant dense<0.000000e+00> : vector<16x32xf32>
    %41 = tpu.matmul %40, %3, %cst_38 {dimension_numbers = #tpu.dot_dimension_numbers<[1], [0], [0], [1], [0, 0, 1, 1], [], []>} : vector<16x32xbf16>, vector<32x32xbf16>, vector<16x32xf32> -> vector<16x32xf32>
    %42 = vector.broadcast %13 : vector<1x32xf32> to vector<16x32xf32>
    %43 = arith.addf %41, %42 : vector<16x32xf32>
    %cst_39 = arith.constant 0.000000e+00 : f32
    %44 = vector.broadcast %cst_39 : f32 to vector<16x32xf32>
    %45 = arith.cmpf ogt, %43, %44 : vector<16x32xf32>
    %cst_40 = arith.constant 0.00999999977 : f32
    %46 = vector.broadcast %cst_40 : f32 to vector<16x32xf32>
    %47 = arith.mulf %46, %43 : vector<16x32xf32>
    %48 = arith.select %45, %43, %47 : vector<16x32xi1>, vector<16x32xf32>
    %49 = arith.truncf %48 : vector<16x32xf32> to vector<16x32xbf16>
    %cst_41 = arith.constant dense<0.000000e+00> : vector<16x32xf32>
    %50 = tpu.matmul %22, %49, %cst_41 {dimension_numbers = #tpu.dot_dimension_numbers<[1], [0], [0], [1], [0, 0, 1, 1], [], []>} : vector<16x16xbf16>, vector<16x32xbf16>, vector<16x32xf32> -> vector<16x32xf32>
    %51 = arith.truncf %50 : vector<16x32xf32> to vector<16x32xbf16>
    %cst_42 = arith.constant dense<0.000000e+00> : vector<16x32xf32>
    %52 = tpu.matmul %51, %4, %cst_42 {dimension_numbers = #tpu.dot_dimension_numbers<[1], [0], [0], [1], [0, 0, 1, 1], [], []>} : vector<16x32xbf16>, vector<32x32xbf16>, vector<16x32xf32> -> vector<16x32xf32>
    %cst_43 = arith.constant dense<0.000000e+00> : vector<16x32xf32>
    %53 = tpu.matmul %49, %5, %cst_43 {dimension_numbers = #tpu.dot_dimension_numbers<[1], [0], [0], [1], [0, 0, 1, 1], [], []>} : vector<16x32xbf16>, vector<32x32xbf16>, vector<16x32xf32> -> vector<16x32xf32>
    %54 = arith.addf %52, %53 : vector<16x32xf32>
    %55 = vector.broadcast %14 : vector<1x32xf32> to vector<16x32xf32>
    %56 = arith.addf %54, %55 : vector<16x32xf32>
    %cst_44 = arith.constant 0.000000e+00 : f32
    %57 = vector.broadcast %cst_44 : f32 to vector<16x32xf32>
    %58 = arith.maximumf %56, %57 : vector<16x32xf32>
    %59 = arith.truncf %58 : vector<16x32xf32> to vector<16x32xbf16>
    %cst_45 = arith.constant dense<0.000000e+00> : vector<16x32xf32>
    %60 = tpu.matmul %59, %6, %cst_45 {dimension_numbers = #tpu.dot_dimension_numbers<[1], [0], [0], [1], [0, 0, 1, 1], [], []>} : vector<16x32xbf16>, vector<32x32xbf16>, vector<16x32xf32> -> vector<16x32xf32>
    %61 = vector.broadcast %15 : vector<1x32xf32> to vector<16x32xf32>
    %62 = arith.addf %60, %61 : vector<16x32xf32>
    %cst_46 = arith.constant 0.000000e+00 : f32
    %63 = vector.broadcast %cst_46 : f32 to vector<16x32xf32>
    %64 = arith.cmpf ogt, %62, %63 : vector<16x32xf32>
    %cst_47 = arith.constant 0.00999999977 : f32
    %65 = vector.broadcast %cst_47 : f32 to vector<16x32xf32>
    %66 = arith.mulf %65, %62 : vector<16x32xf32>
    %67 = arith.select %64, %62, %66 : vector<16x32xi1>, vector<16x32xf32>
    %68 = arith.truncf %67 : vector<16x32xf32> to vector<16x32xbf16>
    %cst_48 = arith.constant dense<0.000000e+00> : vector<16x32xf32>
    %69 = tpu.matmul %22, %68, %cst_48 {dimension_numbers = #tpu.dot_dimension_numbers<[1], [0], [0], [1], [0, 0, 1, 1], [], []>} : vector<16x16xbf16>, vector<16x32xbf16>, vector<16x32xf32> -> vector<16x32xf32>
    %70 = arith.truncf %69 : vector<16x32xf32> to vector<16x32xbf16>
    %cst_49 = arith.constant dense<0.000000e+00> : vector<16x16xf32>
    %71 = tpu.matmul %70, %8, %cst_49 {dimension_numbers = #tpu.dot_dimension_numbers<[1], [0], [0], [1], [0, 0, 1, 1], [], []>} : vector<16x32xbf16>, vector<32x16xbf16>, vector<16x16xf32> -> vector<16x16xf32>
    %cst_50 = arith.constant dense<0.000000e+00> : vector<16x16xf32>
    %72 = tpu.matmul %68, %9, %cst_50 {dimension_numbers = #tpu.dot_dimension_numbers<[1], [0], [0], [1], [0, 0, 1, 1], [], []>} : vector<16x32xbf16>, vector<32x16xbf16>, vector<16x16xf32> -> vector<16x16xf32>
    %73 = arith.addf %71, %72 : vector<16x16xf32>
    %74 = vector.broadcast %19 : vector<1x16xf32> to vector<16x16xf32>
    %75 = arith.addf %73, %74 : vector<16x16xf32>
    %cst_51 = arith.constant 0.000000e+00 : f32
    %76 = vector.broadcast %cst_51 : f32 to vector<16x16xf32>
    %77 = arith.maximumf %75, %76 : vector<16x16xf32>
    %78 = arith.truncf %77 : vector<16x16xf32> to vector<16x16xbf16>
    %cst_52 = arith.constant dense<0.000000e+00> : vector<16x16xf32>
    %79 = tpu.matmul %78, %10, %cst_52 {dimension_numbers = #tpu.dot_dimension_numbers<[1], [0], [0], [1], [0, 0, 1, 1], [], []>} : vector<16x16xbf16>, vector<16x16xbf16>, vector<16x16xf32> -> vector<16x16xf32>
    %80 = vector.broadcast %20 : vector<1x16xf32> to vector<16x16xf32>
    %81 = arith.addf %79, %80 : vector<16x16xf32>
    %cst_53 = arith.constant 0.000000e+00 : f32
    %82 = vector.broadcast %cst_53 : f32 to vector<16x16xf32>
    %83 = arith.cmpf ogt, %81, %82 : vector<16x16xf32>
    %cst_54 = arith.constant 0.00999999977 : f32
    %84 = vector.broadcast %cst_54 : f32 to vector<16x16xf32>
    %85 = arith.mulf %84, %81 : vector<16x16xf32>
    %86 = arith.select %83, %81, %85 : vector<16x16xi1>, vector<16x16xf32>
    %87 = arith.truncf %86 : vector<16x16xf32> to vector<16x16xbf16>
    %cst_55 = arith.constant dense<0.000000e+00> : vector<2x16xf32>
    %88 = tpu.matmul %24, %87, %cst_55 {dimension_numbers = #tpu.dot_dimension_numbers<[1], [0], [0], [1], [0, 0, 1, 1], [], []>} : vector<2x16xbf16>, vector<16x16xbf16>, vector<2x16xf32> -> vector<2x16xf32>
    %89 = arith.truncf %88 : vector<2x16xf32> to vector<2x16xbf16>
    %cst_56 = arith.constant dense<0.000000e+00> : vector<2x32xf32>
    %90 = tpu.matmul %89, %7, %cst_56 {dimension_numbers = #tpu.dot_dimension_numbers<[1], [0], [0], [1], [0, 0, 1, 1], [], []>} : vector<2x16xbf16>, vector<16x32xbf16>, vector<2x32xf32> -> vector<2x32xf32>
    %91 = vector.broadcast %16 : vector<1x32xf32> to vector<2x32xf32>
    %92 = arith.addf %90, %91 : vector<2x32xf32>
    %cst_57 = arith.constant 0.000000e+00 : f32
    %93 = vector.broadcast %cst_57 : f32 to vector<2x32xf32>
    %94 = arith.cmpf ogt, %92, %93 : vector<2x32xf32>
    %cst_58 = arith.constant 0.00999999977 : f32
    %95 = vector.broadcast %cst_58 : f32 to vector<2x32xf32>
    %96 = arith.mulf %95, %92 : vector<2x32xf32>
    %97 = arith.select %94, %92, %96 : vector<2x32xi1>, vector<2x32xf32>
    %98 = vector.broadcast %17 : vector<1x32xf32> to vector<2x32xf32>
    %99 = arith.mulf %97, %98 : vector<2x32xf32>
    %cst_59 = arith.constant dense<0.000000e+00> : vector<2xf32>
    %100 = vector.multi_reduction <add>, %99, %cst_59 [1] : vector<2x32xf32> to vector<2xf32>
    %101 = vector.shape_cast %100 : vector<2xf32> to vector<2x1xf32>
    %102 = vector.broadcast %18 : vector<1x1xf32> to vector<2x1xf32>
    %103 = arith.addf %101, %102 : vector<2x1xf32>
    %cst_60 = arith.constant 0.000000e+00 : f32
    %104 = vector.broadcast %cst_60 : f32 to vector<2x1xf32>
    %105 = arith.maximumf %103, %104 : vector<2x1xf32>
    %c0_61 = arith.constant 0 : index
    %c0_62 = arith.constant 0 : index
    %c0_63 = arith.constant 0 : index
    %106 = vector.load %arg8[%c0_61, %c0_62, %c0_63] : memref<1x2x1xf32, #tpu.memory_space<vmem>>, vector<1x2x1xf32>
    %107 = vector.shape_cast %106 : vector<1x2x1xf32> to vector<2x1xf32>
    %108 = vector.shape_cast %105 : vector<2x1xf32> to vector<1x2x1xf32>
    tpu.vector_store %arg8[%c0_61, %c0_62, %c0_63], %108 {strides = array<i32>} : memref<1x2x1xf32, #tpu.memory_space<vmem>>, vector<1x2x1xf32>,
    return
  }
  func.func @transform_0(%arg0: i32) -> (i32, i32, i32) {
    %c0_i32 = arith.constant 0 : i32
    %c0_i32_0 = arith.constant 0 : i32
    %c0_i32_1 = arith.constant 0 : i32
    return %arg0, %c0_i32, %c0_i32_0 : i32, i32, i32
  }
  func.func @transform_1(%arg0: i32) -> (i32, i32, i32) {
    %c0_i32 = arith.constant 0 : i32
    %c0_i32_0 = arith.constant 0 : i32
    %c0_i32_1 = arith.constant 0 : i32
    return %arg0, %c0_i32, %c0_i32_0 : i32, i32, i32
  }
  func.func @transform_2(%arg0: i32) -> (i32, i32, i32) {
    %c0_i32 = arith.constant 0 : i32
    %c0_i32_0 = arith.constant 0 : i32
    %c0_i32_1 = arith.constant 0 : i32
    return %arg0, %c0_i32, %c0_i32_0 : i32, i32, i32
  }
  func.func @transform_3(%arg0: i32) -> (i32, i32) {
    %c0_i32 = arith.constant 0 : i32
    %c0_i32_0 = arith.constant 0 : i32
    %c0_i32_1 = arith.constant 0 : i32
    return %c0_i32, %c0_i32_0 : i32, i32
  }
  func.func @transform_4(%arg0: i32) -> (i32, i32) {
    %c0_i32 = arith.constant 0 : i32
    %c0_i32_0 = arith.constant 0 : i32
    %c0_i32_1 = arith.constant 0 : i32
    return %c0_i32, %c0_i32_0 : i32, i32
  }
  func.func @transform_5(%arg0: i32) -> (i32, i32) {
    %c0_i32 = arith.constant 0 : i32
    %c0_i32_0 = arith.constant 0 : i32
    %c0_i32_1 = arith.constant 0 : i32
    return %c0_i32, %c0_i32_0 : i32, i32
  }
  func.func @transform_6(%arg0: i32) -> (i32, i32) {
    %c0_i32 = arith.constant 0 : i32
    %c0_i32_0 = arith.constant 0 : i32
    %c0_i32_1 = arith.constant 0 : i32
    return %c0_i32, %c0_i32_0 : i32, i32
  }
  func.func @transform_7(%arg0: i32) -> (i32, i32, i32) {
    %c0_i32 = arith.constant 0 : i32
    %c0_i32_0 = arith.constant 0 : i32
    %c0_i32_1 = arith.constant 0 : i32
    return %arg0, %c0_i32, %c0_i32_0 : i32, i32, i32
  }
}

</mosaic_0001>

<llo_original>
// kernel: tpu_custom_call.1
$region0: #{tpu_custom_call.1}
  #allocation0 [shape = 'u32[]', space=smem, size = 0x4, offset = 0x4, fixed_abs, tag = 'smem constant byte address 0x4 - core index']
  #allocation1 [shape = 'u32[144,128]{1,0:T(1,128)}', space=vmem, size = 0x12000, scoped, tag = 'internal scratch']
  %s0 = inlined_call_operand.vmem [shape: bf16[2,16,16], index: 0, kind: input, shape index: {}]
  %s1 = inlined_call_operand.vmem [shape: bf16[2,16,16], index: 1, kind: input, shape index: {}]
  %s2 = inlined_call_operand.vmem [shape: bf16[2,2,16], index: 2, kind: input, shape index: {}]
  %s3 = inlined_call_operand.vmem [shape: bf16[224,32], index: 3, kind: input, shape index: {}]
  %s4 = inlined_call_operand.vmem [shape: f32[8,32], index: 4, kind: input, shape index: {}]
  %s5 = inlined_call_operand.vmem [shape: bf16[80,16], index: 5, kind: input, shape index: {}]
  %s6 = inlined_call_operand.vmem [shape: f32[2,16], index: 6, kind: input, shape index: {}]
  %s7 = inlined_call_operand.vmem [shape: f32[2,2,1], index: 7, kind: output, shape index: {}]
  %s8 = sld [smem:[#allocation0]]
  $region61: #{tpu_custom_call.1} parent=0
    _
  %s10 = ssub.s32 1, %s8
  %s11 = scalar_select 0, %s10, %s8
  loop: start=0, step=1, limit=4
  $region2: #{tpu_custom_call.1} parent=0 // loop_pre_header
    _
  $region3: #{tpu_custom_call.1} parent=0 // loop_header
    %s13 = sphi 0, %s17
    %p14 = scmp.ge.s32.totalorder %s13, 4
    %s23 = sphi 0, %s25
    %s26 = sphi 0, %s23
    %s27 = sphi 0, %s26
    %s43 = sphi 0, %s27
    %s49 = sphi 0, %s51
    %s52 = sphi 0, %s49
    %s53 = sphi 0, %s52
    %s69 = sphi 0, %s53
    %s75 = sphi 0, %s77
    %s78 = sphi 0, %s75
    %s79 = sphi 0, %s78
    %s95 = sphi 0, %s79
    %s99 = sphi 0, %s99
    %s101 = sphi 0, %s99
    %s102 = sphi 0, %s101
    %s116 = sphi 0, %s102
    %s120 = sphi 0, %s120
    %s122 = sphi 0, %s120
    %s123 = sphi 0, %s122
    %s137 = sphi 0, %s123
    %s141 = sphi 0, %s141
    %s143 = sphi 0, %s141
    %s144 = sphi 0, %s143
    %s158 = sphi 0, %s144
    %s162 = sphi 0, %s162
    %s164 = sphi 0, %s162
    %s165 = sphi 0, %s164
    %s179 = sphi 0, %s165
    %s185 = sphi 0, %s187
    %s188 = sphi 0, %s185
    %s189 = sphi 0, %s188
    %s205 = sphi 0, %s189
  $region4: #{tpu_custom_call.1} parent=0 // loop_header_branch
    %16 = sbr.rel (%p14) target = $region8
  $region5: #{tpu_custom_call.1} parent=0 // loop_body
    %s18 = ssub.s32 %s13, 1
    %s19 = ssub.s32 %s13, 2
    %s20 = sadd.s32 %s13, 1
    %s21 = ssub.s32 %s13, %s20
    %p22 = scmp.eq.s32.totalorder %s21, 0
    %s24 = sadd.s32 %s23, 1
    %s25 = scalar_select %p22, %s23, %s24
    %p28 = pneg %p22
    %p29 = scmp.eq.s32.totalorder %s13, 1
    %p30 = por %p28, %p29
    %p31 = scmp.ne.s32.totalorder %s23, %s26
    %p32 = scmp.eq.s32.totalorder %s13, 0
    %p33 = por %p31, %p32
    %p34 = scmp.ne.s32.totalorder %s23, %s26
    %p35 = scmp.eq.s32.totalorder %s18, 1
    %p36 = por %p34, %p35
    %p37 = scmp.ne.s32.totalorder %s26, %s27
    %p38 = scmp.eq.s32.totalorder %s18, 0
    %p39 = por %p37, %p38
    %p40 = scmp.ne.s32.totalorder %s26, %s27
    %p41 = scmp.eq.s32.totalorder %s19, 1
    %p42 = por %p40, %p41
    %p44 = scmp.ne.s32.totalorder %s27, %s43
    %p45 = scmp.eq.s32.totalorder %s19, 0
    %p46 = por %p44, %p45
    %s47 = ssub.s32 %s13, %s20
    %p48 = scmp.eq.s32.totalorder %s47, 0
    %s50 = sadd.s32 %s49, 1
    %s51 = scalar_select %p48, %s49, %s50
    %p54 = pneg %p48
    %p55 = scmp.eq.s32.totalorder %s13, 1
    %p56 = por %p54, %p55
    %p57 = scmp.ne.s32.totalorder %s49, %s52
    %p58 = scmp.eq.s32.totalorder %s13, 0
    %p59 = por %p57, %p58
    %p60 = scmp.ne.s32.totalorder %s49, %s52
    %p61 = scmp.eq.s32.totalorder %s18, 1
    %p62 = por %p60, %p61
    %p63 = scmp.ne.s32.totalorder %s52, %s53
    %p64 = scmp.eq.s32.totalorder %s18, 0
    %p65 = por %p63, %p64
    %p66 = scmp.ne.s32.totalorder %s52, %s53
    %p67 = scmp.eq.s32.totalorder %s19, 1
    %p68 = por %p66, %p67
    %p70 = scmp.ne.s32.totalorder %s53, %s69
    %p71 = scmp.eq.s32.totalorder %s19, 0
    %p72 = por %p70, %p71
    %s73 = ssub.s32 %s13, %s20
    %p74 = scmp.eq.s32.totalorder %s73, 0
    %s76 = sadd.s32 %s75, 1
    %s77 = scalar_select %p74, %s75, %s76
    %p80 = pneg %p74
    %p81 = scmp.eq.s32.totalorder %s13, 1
    %p82 = por %p80, %p81
    %p83 = scmp.ne.s32.totalorder %s75, %s78
    %p84 = scmp.eq.s32.totalorder %s13, 0
    %p85 = por %p83, %p84
    %p86 = scmp.ne.s32.totalorder %s75, %s78
    %p87 = scmp.eq.s32.totalorder %s18, 1
    %p88 = por %p86, %p87
    %p89 = scmp.ne.s32.totalorder %s78, %s79
    %p90 = scmp.eq.s32.totalorder %s18, 0
    %p91 = por %p89, %p90
    %p92 = scmp.ne.s32.totalorder %s78, %s79
    %p93 = scmp.eq.s32.totalorder %s19, 1
    %p94 = por %p92, %p93
    %p96 = scmp.ne.s32.totalorder %s79, %s95
    %p97 = scmp.eq.s32.totalorder %s19, 0
    %p98 = por %p96, %p97
    %s100 = sadd.s32 %s99, 1
    %p103 = scmp.eq.s32.totalorder %s13, 1
    %p104 = scmp.ne.s32.totalorder %s99, %s101
    %p105 = scmp.eq.s32.totalorder %s13, 0
    %p106 = por %p104, %p105
    %p107 = scmp.ne.s32.totalorder %s99, %s101
    %p108 = scmp.eq.s32.totalorder %s18, 1
    %p109 = por %p107, %p108
    %p110 = scmp.ne.s32.totalorder %s101, %s102
    %p111 = scmp.eq.s32.totalorder %s18, 0
    %p112 = por %p110, %p111
    %p113 = scmp.ne.s32.totalorder %s101, %s102
    %p114 = scmp.eq.s32.totalorder %s19, 1
    %p115 = por %p113, %p114
    %p117 = scmp.ne.s32.totalorder %s102, %s116
    %p118 = scmp.eq.s32.totalorder %s19, 0
    %p119 = por %p117, %p118
    %s121 = sadd.s32 %s120, 1
    %p124 = scmp.eq.s32.totalorder %s13, 1
    %p125 = scmp.ne.s32.totalorder %s120, %s122
    %p126 = scmp.eq.s32.totalorder %s13, 0
    %p127 = por %p125, %p126
    %p128 = scmp.ne.s32.totalorder %s120, %s122
    %p129 = scmp.eq.s32.totalorder %s18, 1
    %p130 = por %p128, %p129
    %p131 = scmp.ne.s32.totalorder %s122, %s123
    %p132 = scmp.eq.s32.totalorder %s18, 0
    %p133 = por %p131, %p132
    %p134 = scmp.ne.s32.totalorder %s122, %s123
    %p135 = scmp.eq.s32.totalorder %s19, 1
    %p136 = por %p134, %p135
    %p138 = scmp.ne.s32.totalorder %s123, %s137
    %p139 = scmp.eq.s32.totalorder %s19, 0
    %p140 = por %p138, %p139
    %s142 = sadd.s32 %s141, 1
    %p145 = scmp.eq.s32.totalorder %s13, 1
    %p146 = scmp.ne.s32.totalorder %s141, %s143
    %p147 = scmp.eq.s32.totalorder %s13, 0
    %p148 = por %p146, %p147
    %p149 = scmp.ne.s32.totalorder %s141, %s143
    %p150 = scmp.eq.s32.totalorder %s18, 1
    %p151 = por %p149, %p150
    %p152 = scmp.ne.s32.totalorder %s143, %s144
    %p153 = scmp.eq.s32.totalorder %s18, 0
    %p154 = por %p152, %p153
    %p155 = scmp.ne.s32.totalorder %s143, %s144
    %p156 = scmp.eq.s32.totalorder %s19, 1
    %p157 = por %p155, %p156
    %p159 = scmp.ne.s32.totalorder %s144, %s158
    %p160 = scmp.eq.s32.totalorder %s19, 0
    %p161 = por %p159, %p160
    %s163 = sadd.s32 %s162, 1
    %p166 = scmp.eq.s32.totalorder %s13, 1
    %p167 = scmp.ne.s32.totalorder %s162, %s164
    %p168 = scmp.eq.s32.totalorder %s13, 0
    %p169 = por %p167, %p168
    %p170 = scmp.ne.s32.totalorder %s162, %s164
    %p171 = scmp.eq.s32.totalorder %s18, 1
    %p172 = por %p170, %p171
    %p173 = scmp.ne.s32.totalorder %s164, %s165
    %p174 = scmp.eq.s32.totalorder %s18, 0
    %p175 = por %p173, %p174
    %p176 = scmp.ne.s32.totalorder %s164, %s165
    %p177 = scmp.eq.s32.totalorder %s19, 1
    %p178 = por %p176, %p177
    %p180 = scmp.ne.s32.totalorder %s165, %s179
    %p181 = scmp.eq.s32.totalorder %s19, 0
    %p182 = por %p180, %p181
    %s183 = ssub.s32 %s13, %s20
    %p184 = scmp.eq.s32.totalorder %s183, 0
    %s186 = sadd.s32 %s185, 1
    %s187 = scalar_select %p184, %s185, %s186
    %p190 = pneg %p184
    %p191 = scmp.eq.s32.totalorder %s13, 1
    %p192 = por %p190, %p191
    %p193 = scmp.ne.s32.totalorder %s185, %s188
    %p194 = scmp.eq.s32.totalorder %s13, 0
    %p195 = por %p193, %p194
    %p196 = scmp.ne.s32.totalorder %s185, %s188
    %p197 = scmp.eq.s32.totalorder %s18, 1
    %p198 = por %p196, %p197
    %p199 = scmp.ne.s32.totalorder %s188, %s189
    %p200 = scmp.eq.s32.totalorder %s18, 0
    %p201 = por %p199, %p200
    %p202 = scmp.ne.s32.totalorder %s188, %s189
    %p203 = scmp.eq.s32.totalorder %s19, 1
    %p204 = por %p202, %p203
    %p206 = scmp.ne.s32.totalorder %s189, %s205
    %p207 = scmp.eq.s32.totalorder %s19, 0
    %p208 = por %p206, %p207
    %p209 = scmp.le.s32.totalorder 1, %s13
    %p210 = scmp.lt.s32.totalorder %s13, 3
    %p211 = pnand %p209, %p210
    %p212 = pneg %p211
    // Predicated region
    $region9: #{tpu_custom_call.1} parent=5 // pred_check
      _
    $region10: #{tpu_custom_call.1} parent=5 // pred_check_branch
      %214 = sbr.rel (%p211) target = $region12
    $region11: #{tpu_custom_call.1} parent=5 // pred_region
      %s215 = ssub.s32 %s13, 1
      // Predicated region
      $region13: #{tpu_custom_call.1} parent=11 // pred_check
        %p216 = pneg %p112
      $region14: #{tpu_custom_call.1} parent=11 // pred_check_branch
        %218 = sbr.rel (%p216) target = $region16
      $region15: #{tpu_custom_call.1} parent=11 // pred_region
        _
      $region16: #{tpu_custom_call.1} parent=11 // pred_fallthru
        _
      // Predicated region
      $region17: #{tpu_custom_call.1} parent=11 // pred_check
        %p219 = pneg %p133
      $region18: #{tpu_custom_call.1} parent=11 // pred_check_branch
        %221 = sbr.rel (%p219) target = $region20
      $region19: #{tpu_custom_call.1} parent=11 // pred_region
        _
      $region20: #{tpu_custom_call.1} parent=11 // pred_fallthru
        _
      // Predicated region
      $region21: #{tpu_custom_call.1} parent=11 // pred_check
        %p222 = pneg %p154
      $region22: #{tpu_custom_call.1} parent=11 // pred_check_branch
        %224 = sbr.rel (%p222) target = $region24
      $region23: #{tpu_custom_call.1} parent=11 // pred_region
        _
      $region24: #{tpu_custom_call.1} parent=11 // pred_fallthru
        _
      // Predicated region
      $region25: #{tpu_custom_call.1} parent=11 // pred_check
        %p225 = pneg %p175
      $region26: #{tpu_custom_call.1} parent=11 // pred_check_branch
        %227 = sbr.rel (%p225) target = $region28
      $region27: #{tpu_custom_call.1} parent=11 // pred_region
        _
      $region28: #{tpu_custom_call.1} parent=11 // pred_fallthru
        _
    $region12: #{tpu_custom_call.1} parent=5 // pred_fallthru
      _
    %p228 = scmp.lt.s32.totalorder %s13, 2
    // Predicated region
    $region29: #{tpu_custom_call.1} parent=5 // pred_check
      %p229 = pneg %p228
    $region30: #{tpu_custom_call.1} parent=5 // pred_check_branch
      %231 = sbr.rel (%p229) target = $region32
    $region31: #{tpu_custom_call.1} parent=5 // pred_region
      // Predicated region
      $region33: #{tpu_custom_call.1} parent=31 // pred_check
        %p232 = pneg %p33
      $region34: #{tpu_custom_call.1} parent=31 // pred_check_branch
        %234 = sbr.rel (%p232) target = $region36
      $region35: #{tpu_custom_call.1} parent=31 // pred_region
        %p235 = scmp.lt.s32.totalorder %s13, 1
        %s236 = scalar_select %p235, %s13, 1
        %s237 = smul.addr %s236, 2
        %s238 = smul.addr %s237, 4
        %s239 = scalar_lea.vmem %s0, %s238
      $region36: #{tpu_custom_call.1} parent=31 // pred_fallthru
        _
      // Predicated region
      $region37: #{tpu_custom_call.1} parent=31 // pred_check
        %p240 = pneg %p59
      $region38: #{tpu_custom_call.1} parent=31 // pred_check_branch
        %242 = sbr.rel (%p240) target = $region40
      $region39: #{tpu_custom_call.1} parent=31 // pred_region
        %p243 = scmp.lt.s32.totalorder %s13, 1
        %s244 = scalar_select %p243, %s13, 1
        %s245 = smul.addr %s244, 2
        %s246 = smul.addr %s245, 4
        %s247 = scalar_lea.vmem %s1, %s246
      $region40: #{tpu_custom_call.1} parent=31 // pred_fallthru
        _
      // Predicated region
      $region41: #{tpu_custom_call.1} parent=31 // pred_check
        %p248 = pneg %p85
      $region42: #{tpu_custom_call.1} parent=31 // pred_check_branch
        %250 = sbr.rel (%p248) target = $region44
      $region43: #{tpu_custom_call.1} parent=31 // pred_region
        %p251 = scmp.lt.s32.totalorder %s13, 1
        %s252 = scalar_select %p251, %s13, 1
        %s253 = scalar_lea.vmem %s2, %s252
      $region44: #{tpu_custom_call.1} parent=31 // pred_fallthru
        _
    $region32: #{tpu_custom_call.1} parent=5 // pred_fallthru
      _
    %p254 = scmp.le.s32.totalorder 1, %s13
    %p255 = scmp.lt.s32.totalorder %s13, 3
    %p256 = pnand %p254, %p255
    %p257 = pneg %p256
    // Predicated region
    $region45: #{tpu_custom_call.1} parent=5 // pred_check
      _
    $region46: #{tpu_custom_call.1} parent=5 // pred_check_branch
      %259 = sbr.rel (%p256) target = $region48
    $region47: #{tpu_custom_call.1} parent=5 // pred_region
      %s260 = ssub.s32 %s13, 1
      %p261 = scmp.lt.s32.totalorder %s18, 1
      %s262 = scalar_select %p261, %s18, 1
      %s263 = smul.addr %s262, 2
      %s264 = smul.addr %s263, 4
      %s265 = scalar_lea.vmem %s0, %s264
      %p266 = pneg %p39
      %p267 = pneg %p36
      %p268 = scmp.lt.s32.totalorder %s18, 1
      %s269 = scalar_select %p268, %s18, 1
      %s270 = smul.addr %s269, 2
      %s271 = smul.addr %s270, 4
      %s272 = scalar_lea.vmem %s1, %s271
      %p273 = pneg %p65
      %p274 = pneg %p62
      %p275 = scmp.lt.s32.totalorder %s18, 1
      %s276 = scalar_select %p275, %s18, 1
      %s277 = scalar_lea.vmem %s2, %s276
      %p278 = pneg %p91
      %p279 = pneg %p88
      %p280 = pneg %p112
      %p281 = pneg %p109
      %p282 = pneg %p133
      %p283 = pneg %p130
      %p284 = pneg %p154
      %p285 = pneg %p151
      %p286 = pneg %p175
      %p287 = pneg %p172
      %p288 = pneg %p201
      %p289 = pneg %p198
      %p290 = scmp.lt.s32.totalorder %s18, 1
      %s291 = scalar_select %p290, %s18, 1
      %s292 = smul.addr %s291, 2
      %s293 = scalar_lea.vmem %s7, %s292
      %p294 = scmp.lt.s32.totalorder %s18, 1
      %s295 = scalar_select %p294, %s18, 1
      %s296 = smul.addr %s295, 2
      %s297 = smul.addr %s296, 4
      %s298 = scalar_lea.vmem %s0, %s297
      %p299 = scmp.lt.s32.totalorder %s18, 1
      %s300 = scalar_select %p299, %s18, 1
      %s301 = smul.addr %s300, 2
      %s302 = smul.addr %s301, 4
      %s303 = scalar_lea.vmem %s1, %s302
      %p304 = scmp.lt.s32.totalorder %s18, 1
      %s305 = scalar_select %p304, %s18, 1
      %s306 = scalar_lea.vmem %s2, %s305
      %p307 = scmp.lt.s32.totalorder %s18, 1
      %s308 = scalar_select %p307, %s18, 1
      %s309 = smul.addr %s308, 2
      %s310 = scalar_lea.vmem %s7, %s309
      %v312 = vld [vmem:[%s3] sm:$0xf]
      %v313 = vld [vmem:[%s3 + $0x4] sm:$0xf]
      %v314 = vld [vmem:[%s3 + $0x8] sm:$0xf]
      %v315 = vld [vmem:[%s3 + $0xc] sm:$0xf]
      %v316 = vld [vmem:[%s3 + $0x10] sm:$0xf]
      %v317 = vld [vmem:[%s3 + $0x14] sm:$0xf]
      %v318 = vld [vmem:[%s3 + $0x18] sm:$0xf]
      %v319 = vld [vmem:[%s3 + $0x1c] sm:$0xf]
      %v320 = vld [vmem:[%s3 + $0x20] sm:$0xf]
      %v321 = vld [vmem:[%s3 + $0x24] sm:$0xf]
      %v322 = vld [vmem:[%s3 + $0x28] sm:$0xf]
      %v323 = vld [vmem:[%s3 + $0x2c] sm:$0xf]
      %v324 = vld [vmem:[%s3 + $0x30] sm:$0xf]
      %v325 = vld [vmem:[%s3 + $0x34] sm:$0xf]
      %v326 = vld [vmem:[%s3 + $0x38] sm:$0xf]
      %v327 = vld [vmem:[%s3 + $0x3c] sm:$0xf]
      %v328 = vld [vmem:[%s3 + $0x40] sm:$0xf]
      %v329 = vld [vmem:[%s3 + $0x44] sm:$0xf]
      %v330 = vld [vmem:[%s3 + $0x48] sm:$0xf]
      %v331 = vld [vmem:[%s3 + $0x4c] sm:$0xf]
      %v332 = vld [vmem:[%s3 + $0x50] sm:$0xf]
      %v333 = vld [vmem:[%s3 + $0x54] sm:$0xf]
      %v334 = vld [vmem:[%s3 + $0x58] sm:$0xf]
      %v335 = vld [vmem:[%s3 + $0x5c] sm:$0xf]
      %v336 = vld [vmem:[%s3 + $0x60] sm:$0xf]
      %v337 = vld [vmem:[%s3 + $0x64] sm:$0xf]
      %v338 = vld [vmem:[%s3 + $0x68] sm:$0xf]
      %v339 = vld [vmem:[%s3 + $0x6c] sm:$0xf]
      %v340 = vld [vmem:[%s5] sm:$0xf]
      %v341 = vld [vmem:[%s5 + $0x4] sm:$0xf]
      %v342 = vld [vmem:[%s5 + $0x8] sm:$0xf]
      %v343 = vld [vmem:[%s5 + $0xc] sm:$0xf]
      %v344 = vld [vmem:[%s5 + $0x10] sm:$0xf]
      %v345 = vld [vmem:[%s5 + $0x14] sm:$0xf]
      %v346 = vld [vmem:[%s5 + $0x18] sm:$0xf]
      %v347 = vld [vmem:[%s5 + $0x1c] sm:$0xf]
      %v348 = vld [vmem:[%s5 + $0x20] sm:$0xf]
      %v349 = vld [vmem:[%s5 + $0x24] sm:$0xf]
      %v350 = vld [vmem:[%s4] sm:$0x1]
      %v351 = vld [vmem:[%s4 + $0x1] sm:$0x1]
      %v352 = vld [vmem:[%s4 + $0x2] sm:$0x1]
      %v353 = vld [vmem:[%s4 + $0x3] sm:$0x1]
      %v354 = vld [vmem:[%s4 + $0x4] sm:$0x1]
      %v355 = vld [vmem:[%s4 + $0x5] sm:$0x1]
      %v356 = vld [vmem:[%s4 + $0x6] sm:$0x1]
      %v357 = vld [vmem:[%s4 + $0x7] sm:$0x1]
      %v358 = vld [vmem:[%s6] sm:$0x1]
      %v359 = vld [vmem:[%s6 + $0x1] sm:$0x1]
      %v360 = vld [vmem:[%s303] sm:$0xf]
      %v361 = vld [vmem:[%s303 + $0x4] sm:$0xf]
      %v362 = vld [vmem:[%s306] sm:$0x1]
      %v363 = vld [vmem:[%s298] sm:$0xf]
      %v364 = vld [vmem:[%s298 + $0x4] sm:$0xf]
      %v365 = vlaneseq
      %v366 = vshrl.u32 %v365, 7
      %v367 = vsub.s32 0, %v366
      %v368 = vrot.slane %v350, %v367
      %v371 = vunpack.c.l.b16 %v363
      %v372 = vunpack.c.l.b16 %v364
      %v373 = vpack.c.b16 %v372, %v371
      %v376 = vunpack.c.l.b16 %v312
      %v377 = vunpack.c.l.b16 %v313
      %v378 = vpack.c.b16 %v377, %v376
      %vm380 = vcmask 130048
      %v382 = vsel %vm380, %v373, 0
      %384 = vmatprep.subr.bf16.mxu0 0
      %385 = vmatpush1.bf16.msra.mxu0 %v378
      %386 = vmatprep.subr.bf16.mxu0 0
      %387 = vmatpush1.bf16.msra.mxu0 0
      %388 = vmatprep.subr.bf16.mxu0 0
      %389 = vmatpush1.bf16.msra.mxu0 0
      %390 = vmatprep.subr.bf16.mxu0 0
      %391 = vmatpush1.bf16.msra.mxu0 0
      %392 = vmatprep.subr.bf16.mxu0 0
      %393 = vmatpush1.bf16.msra.mxu0 0
      %394 = vmatprep.subr.bf16.mxu0 0
      %395 = vmatpush1.bf16.msra.mxu0 0
      %396 = vmatprep.subr.bf16.mxu0 0
      %397 = vmatpush1.bf16.msra.mxu0 0
      %398 = vmatprep.subr.bf16.mxu0 0
      %399 = vmatpush1.bf16.msra.mxu0 0
      %400 = vmatprep.subr.bf16.mxu0 0
      %401 = vmatpush1.bf16.msra.mxu0 0
      %402 = vmatprep.subr.bf16.mxu0 0
      %403 = vmatpush1.bf16.msra.mxu0 0
      %404 = vmatprep.subr.bf16.mxu0 0
      %405 = vmatpush1.bf16.msra.mxu0 0
      %406 = vmatprep.subr.bf16.mxu0 0
      %407 = vmatpush1.bf16.msra.mxu0 0
      %408 = vmatprep.subr.bf16.mxu0 0
      %409 = vmatpush1.bf16.msra.mxu0 0
      %410 = vmatprep.subr.bf16.mxu0 0
      %411 = vmatpush1.bf16.msra.mxu0 0
      %412 = vmatprep.subr.bf16.mxu0 0
      %413 = vmatpush1.bf16.msra.mxu0 0
      %414 = vmatprep.subr.bf16.mxu0 0
      %415 = vmatpush1.bf16.msra.mxu0 0
      %416 = vmatprep.mubr.bf16.mxu0 0
      %417 = vmatmul.mubr.bf16.gmra.mrb[0].mxu0 %v382
      %v418 = vpop.f32.mrb[0].mxu0
      %v419 = vadd.f32 %v368, %v418
      %v420 = vpop.f32.mrb[0].mxu0
      %v421 = vpop.f32.mrb[0].mxu0
      %v422 = vadd.f32 %v368, %v421
      %v423 = vpop.f32.mrb[0].mxu0
      %424 = vdwg.mxu0
      %v425 = vpack.c.bf16 %v422, %v419
      %v428 = vunpack.c.l.b16 %v360
      %v429 = vunpack.c.l.b16 %v361
      %v430 = vpack.c.b16 %v429, %v428
      %v432 = vsel %vm380, %v430, 0
      %434 = vmatprep.subr.bf16.mxu0 0
      %435 = vmatpush1.bf16.msra.mxu0 %v425
      %436 = vmatprep.subr.bf16.mxu0 0
      %437 = vmatpush1.bf16.msra.mxu0 0
      %438 = vmatprep.subr.bf16.mxu0 0
      %439 = vmatpush1.bf16.msra.mxu0 0
      %440 = vmatprep.subr.bf16.mxu0 0
      %441 = vmatpush1.bf16.msra.mxu0 0
      %442 = vmatprep.subr.bf16.mxu0 0
      %443 = vmatpush1.bf16.msra.mxu0 0
      %444 = vmatprep.subr.bf16.mxu0 0
      %445 = vmatpush1.bf16.msra.mxu0 0
      %446 = vmatprep.subr.bf16.mxu0 0
      %447 = vmatpush1.bf16.msra.mxu0 0
      %448 = vmatprep.subr.bf16.mxu0 0
      %449 = vmatpush1.bf16.msra.mxu0 0
      %450 = vmatprep.subr.bf16.mxu0 0
      %451 = vmatpush1.bf16.msra.mxu0 0
      %452 = vmatprep.subr.bf16.mxu0 0
      %453 = vmatpush1.bf16.msra.mxu0 0
      %454 = vmatprep.subr.bf16.mxu0 0
      %455 = vmatpush1.bf16.msra.mxu0 0
      %456 = vmatprep.subr.bf16.mxu0 0
      %457 = vmatpush1.bf16.msra.mxu0 0
      %458 = vmatprep.subr.bf16.mxu0 0
      %459 = vmatpush1.bf16.msra.mxu0 0
      %460 = vmatprep.subr.bf16.mxu0 0
      %461 = vmatpush1.bf16.msra.mxu0 0
      %462 = vmatprep.subr.bf16.mxu0 0
      %463 = vmatpush1.bf16.msra.mxu0 0
      %464 = vmatprep.subr.bf16.mxu0 0
      %465 = vmatpush1.bf16.msra.mxu0 0
      %466 = vmatprep.mubr.bf16.mxu0 0
      %467 = vmatmul.mubr.bf16.gmra.mrb[0].mxu0 %v432
      %v468 = vpop.f32.mrb[0].mxu0
      %v469 = vadd.f32 0.0, %v468
      %v470 = vpop.f32.mrb[0].mxu0
      %v471 = vpop.f32.mrb[0].mxu0
      %v472 = vadd.f32 0.0, %v471
      %v473 = vpop.f32.mrb[0].mxu0
      %474 = vdwg.mxu0
      %v475 = vpack.c.bf16 %v472, %v469
      %v480 = vunpack.c.l.b16 %v318
      %v481 = vunpack.c.l.b16 %v319
      %v482 = vunpack.c.l.b16 %v320
      %v483 = vunpack.c.l.b16 %v321
      %v484 = vpack.c.b16 %v481, %v480
      %v485 = vpack.c.b16 %v483, %v482
      %vm488 = vcmask 261120
      %v490 = vsel %vm488, %v425, 0
      %492 = vmatprep.subr.bf16.mxu0 0
      %493 = vmatpush1.bf16.msra.mxu0 %v484
      %494 = vmatprep.subr.bf16.mxu0 0
      %495 = vmatpush1.bf16.msra.mxu0 %v485
      %496 = vmatprep.subr.bf16.mxu0 0
      %497 = vmatpush1.bf16.msra.mxu0 0
      %498 = vmatprep.subr.bf16.mxu0 0
      %499 = vmatpush1.bf16.msra.mxu0 0
      %500 = vmatprep.subr.bf16.mxu0 0
      %501 = vmatpush1.bf16.msra.mxu0 0
      %502 = vmatprep.subr.bf16.mxu0 0
      %503 = vmatpush1.bf16.msra.mxu0 0
      %504 = vmatprep.subr.bf16.mxu0 0
      %505 = vmatpush1.bf16.msra.mxu0 0
      %506 = vmatprep.subr.bf16.mxu0 0
      %507 = vmatpush1.bf16.msra.mxu0 0
      %508 = vmatprep.subr.bf16.mxu0 0
      %509 = vmatpush1.bf16.msra.mxu0 0
      %510 = vmatprep.subr.bf16.mxu0 0
      %511 = vmatpush1.bf16.msra.mxu0 0
      %512 = vmatprep.subr.bf16.mxu0 0
      %513 = vmatpush1.bf16.msra.mxu0 0
      %514 = vmatprep.subr.bf16.mxu0 0
      %515 = vmatpush1.bf16.msra.mxu0 0
      %516 = vmatprep.subr.bf16.mxu0 0
      %517 = vmatpush1.bf16.msra.mxu0 0
      %518 = vmatprep.subr.bf16.mxu0 0
      %519 = vmatpush1.bf16.msra.mxu0 0
      %520 = vmatprep.subr.bf16.mxu0 0
      %521 = vmatpush1.bf16.msra.mxu0 0
      %522 = vmatprep.subr.bf16.mxu0 0
      %523 = vmatpush1.bf16.msra.mxu0 0
      %524 = vmatprep.mubr.bf16.mxu0 0
      %525 = vmatmul.mubr.bf16.gmra.mrb[0].mxu0 %v490
      %v526 = vpop.f32.mrb[0].mxu0
      %v527 = vadd.f32 0.0, %v526
      %v528 = vpop.f32.mrb[0].mxu0
      %v529 = vpop.f32.mrb[0].mxu0
      %v530 = vadd.f32 0.0, %v529
      %v531 = vpop.f32.mrb[0].mxu0
      %532 = vdwg.mxu0
      %v537 = vunpack.c.l.b16 %v314
      %v538 = vunpack.c.l.b16 %v315
      %v539 = vunpack.c.l.b16 %v316
      %v540 = vunpack.c.l.b16 %v317
      %v541 = vpack.c.b16 %v538, %v537
      %v542 = vpack.c.b16 %v540, %v539
      %v546 = vsel %vm488, %v475, 0
      %548 = vmatprep.subr.bf16.mxu0 0
      %549 = vmatpush1.bf16.msra.mxu0 %v541
      %550 = vmatprep.subr.bf16.mxu0 0
      %551 = vmatpush1.bf16.msra.mxu0 %v542
      %552 = vmatprep.subr.bf16.mxu0 0
      %553 = vmatpush1.bf16.msra.mxu0 0
      %554 = vmatprep.subr.bf16.mxu0 0
      %555 = vmatpush1.bf16.msra.mxu0 0
      %556 = vmatprep.subr.bf16.mxu0 0
      %557 = vmatpush1.bf16.msra.mxu0 0
      %558 = vmatprep.subr.bf16.mxu0 0
      %559 = vmatpush1.bf16.msra.mxu0 0
      %560 = vmatprep.subr.bf16.mxu0 0
      %561 = vmatpush1.bf16.msra.mxu0 0
      %562 = vmatprep.subr.bf16.mxu0 0
      %563 = vmatpush1.bf16.msra.mxu0 0
      %564 = vmatprep.subr.bf16.mxu0 0
      %565 = vmatpush1.bf16.msra.mxu0 0
      %566 = vmatprep.subr.bf16.mxu0 0
      %567 = vmatpush1.bf16.msra.mxu0 0
      %568 = vmatprep.subr.bf16.mxu0 0
      %569 = vmatpush1.bf16.msra.mxu0 0
      %570 = vmatprep.subr.bf16.mxu0 0
      %571 = vmatpush1.bf16.msra.mxu0 0
      %572 = vmatprep.subr.bf16.mxu0 0
      %573 = vmatpush1.bf16.msra.mxu0 0
      %574 = vmatprep.subr.bf16.mxu0 0
      %575 = vmatpush1.bf16.msra.mxu0 0
      %576 = vmatprep.subr.bf16.mxu0 0
      %577 = vmatpush1.bf16.msra.mxu0 0
      %578 = vmatprep.subr.bf16.mxu0 0
      %579 = vmatpush1.bf16.msra.mxu0 0
      %580 = vmatprep.mubr.bf16.mxu0 0
      %581 = vmatmul.mubr.bf16.gmra.mrb[0].mxu0 %v546
      %v582 = vpop.f32.mrb[0].mxu0
      %v583 = vadd.f32 %v527, %v582
      %v584 = vpop.f32.mrb[0].mxu0
      %v585 = vpop.f32.mrb[0].mxu0
      %v586 = vadd.f32 %v530, %v585
      %v587 = vpop.f32.mrb[0].mxu0
      %588 = vdwg.mxu0
      %v589 = vlaneseq
      %v590 = vshrl.u32 %v589, 7
      %v591 = vsub.s32 0, %v590
      %v592 = vrot.slane %v351, %v591
      %v593 = vadd.f32 %v583, %v592
      %v594 = vadd.f32 %v586, %v592
      %v595 = vmax.f32 %v593, 0.0
      %v596 = vmax.f32 %v594, 0.0
      %v597 = vpack.c.bf16 %v596, %v595
      %v598 = vlaneseq
      %v599 = vshrl.u32 %v598, 7
      %v600 = vsub.s32 0, %v599
      %v601 = vrot.slane %v352, %v600
      %v606 = vunpack.c.l.b16 %v322
      %v607 = vunpack.c.l.b16 %v323
      %v608 = vunpack.c.l.b16 %v324
      %v609 = vunpack.c.l.b16 %v325
      %v610 = vpack.c.b16 %v607, %v606
      %v611 = vpack.c.b16 %v609, %v608
      %v615 = vsel %vm488, %v597, 0
      %617 = vmatprep.subr.bf16.mxu0 0
      %618 = vmatpush1.bf16.msra.mxu0 %v610
      %619 = vmatprep.subr.bf16.mxu0 0
      %620 = vmatpush1.bf16.msra.mxu0 %v611
      %621 = vmatprep.subr.bf16.mxu0 0
      %622 = vmatpush1.bf16.msra.mxu0 0
      %623 = vmatprep.subr.bf16.mxu0 0
      %624 = vmatpush1.bf16.msra.mxu0 0
      %625 = vmatprep.subr.bf16.mxu0 0
      %626 = vmatpush1.bf16.msra.mxu0 0
      %627 = vmatprep.subr.bf16.mxu0 0
      %628 = vmatpush1.bf16.msra.mxu0 0
      %629 = vmatprep.subr.bf16.mxu0 0
      %630 = vmatpush1.bf16.msra.mxu0 0
      %631 = vmatprep.subr.bf16.mxu0 0
      %632 = vmatpush1.bf16.msra.mxu0 0
      %633 = vmatprep.subr.bf16.mxu0 0
      %634 = vmatpush1.bf16.msra.mxu0 0
      %635 = vmatprep.subr.bf16.mxu0 0
      %636 = vmatpush1.bf16.msra.mxu0 0
      %637 = vmatprep.subr.bf16.mxu0 0
      %638 = vmatpush1.bf16.msra.mxu0 0
      %639 = vmatprep.subr.bf16.mxu0 0
      %640 = vmatpush1.bf16.msra.mxu0 0
      %641 = vmatprep.subr.bf16.mxu0 0
      %642 = vmatpush1.bf16.msra.mxu0 0
      %643 = vmatprep.subr.bf16.mxu0 0
      %644 = vmatpush1.bf16.msra.mxu0 0
      %645 = vmatprep.subr.bf16.mxu0 0
      %646 = vmatpush1.bf16.msra.mxu0 0
      %647 = vmatprep.subr.bf16.mxu0 0
      %648 = vmatpush1.bf16.msra.mxu0 0
      %649 = vmatprep.mubr.bf16.mxu0 0
      %650 = vmatmul.mubr.bf16.gmra.mrb[0].mxu0 %v615
      %v651 = vpop.f32.mrb[0].mxu0
      %v652 = vadd.f32 %v601, %v651
      %v653 = vpop.f32.mrb[0].mxu0
      %v654 = vpop.f32.mrb[0].mxu0
      %v655 = vadd.f32 %v601, %v654
      %v656 = vpop.f32.mrb[0].mxu0
      %657 = vdwg.mxu0
      %vm658 = vcmp.gt.f32.partialorder %v652, 0.0
      %vm659 = vcmp.gt.f32.partialorder %v655, 0.0
      %v660 = vmul.f32 %v652, 0.01
      %v661 = vmul.f32 %v655, 0.01
      %v662 = vsel %vm658, %v652, %v660
      %v663 = vsel %vm659, %v655, %v661
      %v664 = vpack.c.bf16 %v663, %v662
      %665 = vmatprep.subr.bf16.mxu0 0
      %666 = vmatpush1.bf16.msra.mxu0 %v664
      %667 = vmatprep.subr.bf16.mxu0 0
      %668 = vmatpush1.bf16.msra.mxu0 0
      %669 = vmatprep.subr.bf16.mxu0 0
      %670 = vmatpush1.bf16.msra.mxu0 0
      %671 = vmatprep.subr.bf16.mxu0 0
      %672 = vmatpush1.bf16.msra.mxu0 0
      %673 = vmatprep.subr.bf16.mxu0 0
      %674 = vmatpush1.bf16.msra.mxu0 0
      %675 = vmatprep.subr.bf16.mxu0 0
      %676 = vmatpush1.bf16.msra.mxu0 0
      %677 = vmatprep.subr.bf16.mxu0 0
      %678 = vmatpush1.bf16.msra.mxu0 0
      %679 = vmatprep.subr.bf16.mxu0 0
      %680 = vmatpush1.bf16.msra.mxu0 0
      %681 = vmatprep.subr.bf16.mxu0 0
      %682 = vmatpush1.bf16.msra.mxu0 0
      %683 = vmatprep.subr.bf16.mxu0 0
      %684 = vmatpush1.bf16.msra.mxu0 0
      %685 = vmatprep.subr.bf16.mxu0 0
      %686 = vmatpush1.bf16.msra.mxu0 0
      %687 = vmatprep.subr.bf16.mxu0 0
      %688 = vmatpush1.bf16.msra.mxu0 0
      %689 = vmatprep.subr.bf16.mxu0 0
      %690 = vmatpush1.bf16.msra.mxu0 0
      %691 = vmatprep.subr.bf16.mxu0 0
      %692 = vmatpush1.bf16.msra.mxu0 0
      %693 = vmatprep.subr.bf16.mxu0 0
      %694 = vmatpush1.bf16.msra.mxu0 0
      %695 = vmatprep.subr.bf16.mxu0 0
      %696 = vmatpush1.bf16.msra.mxu0 0
      %697 = vmatprep.mubr.bf16.mxu0 0
      %698 = vmatmul.mubr.bf16.gmra.mrb[0].mxu0 %v432
      %v699 = vpop.f32.mrb[0].mxu0
      %v700 = vadd.f32 0.0, %v699
      %v701 = vpop.f32.mrb[0].mxu0
      %v702 = vpop.f32.mrb[0].mxu0
      %v703 = vadd.f32 0.0, %v702
      %v704 = vpop.f32.mrb[0].mxu0
      %705 = vdwg.mxu0
      %v706 = vpack.c.bf16 %v703, %v700
      %v711 = vunpack.c.l.b16 %v330
      %v712 = vunpack.c.l.b16 %v331
      %v713 = vunpack.c.l.b16 %v332
      %v714 = vunpack.c.l.b16 %v333
      %v715 = vpack.c.b16 %v712, %v711
      %v716 = vpack.c.b16 %v714, %v713
      %v720 = vsel %vm488, %v664, 0
      %722 = vmatprep.subr.bf16.mxu0 0
      %723 = vmatpush1.bf16.msra.mxu0 %v715
      %724 = vmatprep.subr.bf16.mxu0 0
      %725 = vmatpush1.bf16.msra.mxu0 %v716
      %726 = vmatprep.subr.bf16.mxu0 0
      %727 = vmatpush1.bf16.msra.mxu0 0
      %728 = vmatprep.subr.bf16.mxu0 0
      %729 = vmatpush1.bf16.msra.mxu0 0
      %730 = vmatprep.subr.bf16.mxu0 0
      %731 = vmatpush1.bf16.msra.mxu0 0
      %732 = vmatprep.subr.bf16.mxu0 0
      %733 = vmatpush1.bf16.msra.mxu0 0
      %734 = vmatprep.subr.bf16.mxu0 0
      %735 = vmatpush1.bf16.msra.mxu0 0
      %736 = vmatprep.subr.bf16.mxu0 0
      %737 = vmatpush1.bf16.msra.mxu0 0
      %738 = vmatprep.subr.bf16.mxu0 0
      %739 = vmatpush1.bf16.msra.mxu0 0
      %740 = vmatprep.subr.bf16.mxu0 0
      %741 = vmatpush1.bf16.msra.mxu0 0
      %742 = vmatprep.subr.bf16.mxu0 0
      %743 = vmatpush1.bf16.msra.mxu0 0
      %744 = vmatprep.subr.bf16.mxu0 0
      %745 = vmatpush1.bf16.msra.mxu0 0
      %746 = vmatprep.subr.bf16.mxu0 0
      %747 = vmatpush1.bf16.msra.mxu0 0
      %748 = vmatprep.subr.bf16.mxu0 0
      %749 = vmatpush1.bf16.msra.mxu0 0
      %750 = vmatprep.subr.bf16.mxu0 0
      %751 = vmatpush1.bf16.msra.mxu0 0
      %752 = vmatprep.subr.bf16.mxu0 0
      %753 = vmatpush1.bf16.msra.mxu0 0
      %754 = vmatprep.mubr.bf16.mxu0 0
      %755 = vmatmul.mubr.bf16.gmra.mrb[0].mxu0 %v720
      %v756 = vpop.f32.mrb[0].mxu0
      %v757 = vadd.f32 0.0, %v756
      %v758 = vpop.f32.mrb[0].mxu0
      %v759 = vpop.f32.mrb[0].mxu0
      %v760 = vadd.f32 0.0, %v759
      %v761 = vpop.f32.mrb[0].mxu0
      %762 = vdwg.mxu0
      %v767 = vunpack.c.l.b16 %v326
      %v768 = vunpack.c.l.b16 %v327
      %v769 = vunpack.c.l.b16 %v328
      %v770 = vunpack.c.l.b16 %v329
      %v771 = vpack.c.b16 %v768, %v767
      %v772 = vpack.c.b16 %v770, %v769
      %v776 = vsel %vm488, %v706, 0
      %778 = vmatprep.subr.bf16.mxu0 0
      %779 = vmatpush1.bf16.msra.mxu0 %v771
      %780 = vmatprep.subr.bf16.mxu0 0
      %781 = vmatpush1.bf16.msra.mxu0 %v772
      %782 = vmatprep.subr.bf16.mxu0 0
      %783 = vmatpush1.bf16.msra.mxu0 0
      %784 = vmatprep.subr.bf16.mxu0 0
      %785 = vmatpush1.bf16.msra.mxu0 0
      %786 = vmatprep.subr.bf16.mxu0 0
      %787 = vmatpush1.bf16.msra.mxu0 0
      %788 = vmatprep.subr.bf16.mxu0 0
      %789 = vmatpush1.bf16.msra.mxu0 0
      %790 = vmatprep.subr.bf16.mxu0 0
      %791 = vmatpush1.bf16.msra.mxu0 0
      %792 = vmatprep.subr.bf16.mxu0 0
      %793 = vmatpush1.bf16.msra.mxu0 0
      %794 = vmatprep.subr.bf16.mxu0 0
      %795 = vmatpush1.bf16.msra.mxu0 0
      %796 = vmatprep.subr.bf16.mxu0 0
      %797 = vmatpush1.bf16.msra.mxu0 0
      %798 = vmatprep.subr.bf16.mxu0 0
      %799 = vmatpush1.bf16.msra.mxu0 0
      %800 = vmatprep.subr.bf16.mxu0 0
      %801 = vmatpush1.bf16.msra.mxu0 0
      %802 = vmatprep.subr.bf16.mxu0 0
      %803 = vmatpush1.bf16.msra.mxu0 0
      %804 = vmatprep.subr.bf16.mxu0 0
      %805 = vmatpush1.bf16.msra.mxu0 0
      %806 = vmatprep.subr.bf16.mxu0 0
      %807 = vmatpush1.bf16.msra.mxu0 0
      %808 = vmatprep.subr.bf16.mxu0 0
      %809 = vmatpush1.bf16.msra.mxu0 0
      %810 = vmatprep.mubr.bf16.mxu0 0
      %811 = vmatmul.mubr.bf16.gmra.mrb[0].mxu0 %v776
      %v812 = vpop.f32.mrb[0].mxu0
      %v813 = vadd.f32 %v757, %v812
      %v814 = vpop.f32.mrb[0].mxu0
      %v815 = vpop.f32.mrb[0].mxu0
      %v816 = vadd.f32 %v760, %v815
      %v817 = vpop.f32.mrb[0].mxu0
      %818 = vdwg.mxu0
      %v819 = vlaneseq
      %v820 = vshrl.u32 %v819, 7
      %v821 = vsub.s32 0, %v820
      %v822 = vrot.slane %v353, %v821
      %v823 = vadd.f32 %v813, %v822
      %v824 = vadd.f32 %v816, %v822
      %v825 = vmax.f32 %v823, 0.0
      %v826 = vmax.f32 %v824, 0.0
      %v827 = vpack.c.bf16 %v826, %v825
      %v828 = vlaneseq
      %v829 = vshrl.u32 %v828, 7
      %v830 = vsub.s32 0, %v829
      %v831 = vrot.slane %v354, %v830
      %v836 = vunpack.c.l.b16 %v334
      %v837 = vunpack.c.l.b16 %v335
      %v838 = vunpack.c.l.b16 %v336
      %v839 = vunpack.c.l.b16 %v337
      %v840 = vpack.c.b16 %v837, %v836
      %v841 = vpack.c.b16 %v839, %v838
      %v845 = vsel %vm488, %v827, 0
      %847 = vmatprep.subr.bf16.mxu0 0
      %848 = vmatpush1.bf16.msra.mxu0 %v840
      %849 = vmatprep.subr.bf16.mxu0 0
      %850 = vmatpush1.bf16.msra.mxu0 %v841
      %851 = vmatprep.subr.bf16.mxu0 0
      %852 = vmatpush1.bf16.msra.mxu0 0
      %853 = vmatprep.subr.bf16.mxu0 0
      %854 = vmatpush1.bf16.msra.mxu0 0
      %855 = vmatprep.subr.bf16.mxu0 0
      %856 = vmatpush1.bf16.msra.mxu0 0
      %857 = vmatprep.subr.bf16.mxu0 0
      %858 = vmatpush1.bf16.msra.mxu0 0
      %859 = vmatprep.subr.bf16.mxu0 0
      %860 = vmatpush1.bf16.msra.mxu0 0
      %861 = vmatprep.subr.bf16.mxu0 0
      %862 = vmatpush1.bf16.msra.mxu0 0
      %863 = vmatprep.subr.bf16.mxu0 0
      %864 = vmatpush1.bf16.msra.mxu0 0
      %865 = vmatprep.subr.bf16.mxu0 0
      %866 = vmatpush1.bf16.msra.mxu0 0
      %867 = vmatprep.subr.bf16.mxu0 0
      %868 = vmatpush1.bf16.msra.mxu0 0
      %869 = vmatprep.subr.bf16.mxu0 0
      %870 = vmatpush1.bf16.msra.mxu0 0
      %871 = vmatprep.subr.bf16.mxu0 0
      %872 = vmatpush1.bf16.msra.mxu0 0
      %873 = vmatprep.subr.bf16.mxu0 0
      %874 = vmatpush1.bf16.msra.mxu0 0
      %875 = vmatprep.subr.bf16.mxu0 0
      %876 = vmatpush1.bf16.msra.mxu0 0
      %877 = vmatprep.subr.bf16.mxu0 0
      %878 = vmatpush1.bf16.msra.mxu0 0
      %879 = vmatprep.mubr.bf16.mxu0 0
      %880 = vmatmul.mubr.bf16.gmra.mrb[0].mxu0 %v845
      %v881 = vpop.f32.mrb[0].mxu0
      %v882 = vadd.f32 %v831, %v881
      %v883 = vpop.f32.mrb[0].mxu0
      %v884 = vpop.f32.mrb[0].mxu0
      %v885 = vadd.f32 %v831, %v884
      %v886 = vpop.f32.mrb[0].mxu0
      %887 = vdwg.mxu0
      %vm888 = vcmp.gt.f32.partialorder %v882, 0.0
      %vm889 = vcmp.gt.f32.partialorder %v885, 0.0
      %v890 = vmul.f32 %v882, 0.01
      %v891 = vmul.f32 %v885, 0.01
      %v892 = vsel %vm888, %v882, %v890
      %v893 = vsel %vm889, %v885, %v891
      %v894 = vpack.c.bf16 %v893, %v892
      %895 = vmatprep.subr.bf16.mxu0 0
      %896 = vmatpush1.bf16.msra.mxu0 %v894
      %897 = vmatprep.subr.bf16.mxu0 0
      %898 = vmatpush1.bf16.msra.mxu0 0
      %899 = vmatprep.subr.bf16.mxu0 0
      %900 = vmatpush1.bf16.msra.mxu0 0
      %901 = vmatprep.subr.bf16.mxu0 0
      %902 = vmatpush1.bf16.msra.mxu0 0
      %903 = vmatprep.subr.bf16.mxu0 0
      %904 = vmatpush1.bf16.msra.mxu0 0
      %905 = vmatprep.subr.bf16.mxu0 0
      %906 = vmatpush1.bf16.msra.mxu0 0
      %907 = vmatprep.subr.bf16.mxu0 0
      %908 = vmatpush1.bf16.msra.mxu0 0
      %909 = vmatprep.subr.bf16.mxu0 0
      %910 = vmatpush1.bf16.msra.mxu0 0
      %911 = vmatprep.subr.bf16.mxu0 0
      %912 = vmatpush1.bf16.msra.mxu0 0
      %913 = vmatprep.subr.bf16.mxu0 0
      %914 = vmatpush1.bf16.msra.mxu0 0
      %915 = vmatprep.subr.bf16.mxu0 0
      %916 = vmatpush1.bf16.msra.mxu0 0
      %917 = vmatprep.subr.bf16.mxu0 0
      %918 = vmatpush1.bf16.msra.mxu0 0
      %919 = vmatprep.subr.bf16.mxu0 0
      %920 = vmatpush1.bf16.msra.mxu0 0
      %921 = vmatprep.subr.bf16.mxu0 0
      %922 = vmatpush1.bf16.msra.mxu0 0
      %923 = vmatprep.subr.bf16.mxu0 0
      %924 = vmatpush1.bf16.msra.mxu0 0
      %925 = vmatprep.subr.bf16.mxu0 0
      %926 = vmatpush1.bf16.msra.mxu0 0
      %927 = vmatprep.mubr.bf16.mxu0 0
      %928 = vmatmul.mubr.bf16.gmra.mrb[0].mxu0 %v432
      %v929 = vpop.f32.mrb[0].mxu0
      %v930 = vadd.f32 0.0, %v929
      %v931 = vpop.f32.mrb[0].mxu0
      %v932 = vpop.f32.mrb[0].mxu0
      %v933 = vadd.f32 0.0, %v932
      %v934 = vpop.f32.mrb[0].mxu0
      %935 = vdwg.mxu0
      %v936 = vpack.c.bf16 %v933, %v930
      %v941 = vunpack.c.l.b16 %v344
      %v942 = vunpack.c.l.b16 %v345
      %v943 = vunpack.c.l.b16 %v346
      %v944 = vunpack.c.l.b16 %v347
      %v945 = vpack.c.b16 %v942, %v941
      %v946 = vpack.c.b16 %v944, %v943
      %v950 = vsel %vm488, %v894, 0
      %952 = vmatprep.subr.bf16.mxu0 0
      %953 = vmatpush1.bf16.msra.mxu0 %v945
      %954 = vmatprep.subr.bf16.mxu0 0
      %955 = vmatpush1.bf16.msra.mxu0 %v946
      %956 = vmatprep.subr.bf16.mxu0 0
      %957 = vmatpush1.bf16.msra.mxu0 0
      %958 = vmatprep.subr.bf16.mxu0 0
      %959 = vmatpush1.bf16.msra.mxu0 0
      %960 = vmatprep.subr.bf16.mxu0 0
      %961 = vmatpush1.bf16.msra.mxu0 0
      %962 = vmatprep.subr.bf16.mxu0 0
      %963 = vmatpush1.bf16.msra.mxu0 0
      %964 = vmatprep.subr.bf16.mxu0 0
      %965 = vmatpush1.bf16.msra.mxu0 0
      %966 = vmatprep.subr.bf16.mxu0 0
      %967 = vmatpush1.bf16.msra.mxu0 0
      %968 = vmatprep.subr.bf16.mxu0 0
      %969 = vmatpush1.bf16.msra.mxu0 0
      %970 = vmatprep.subr.bf16.mxu0 0
      %971 = vmatpush1.bf16.msra.mxu0 0
      %972 = vmatprep.subr.bf16.mxu0 0
      %973 = vmatpush1.bf16.msra.mxu0 0
      %974 = vmatprep.subr.bf16.mxu0 0
      %975 = vmatpush1.bf16.msra.mxu0 0
      %976 = vmatprep.subr.bf16.mxu0 0
      %977 = vmatpush1.bf16.msra.mxu0 0
      %978 = vmatprep.subr.bf16.mxu0 0
      %979 = vmatpush1.bf16.msra.mxu0 0
      %980 = vmatprep.subr.bf16.mxu0 0
      %981 = vmatpush1.bf16.msra.mxu0 0
      %982 = vmatprep.subr.bf16.mxu0 0
      %983 = vmatpush1.bf16.msra.mxu0 0
      %984 = vmatprep.mubr.bf16.mxu0 0
      %985 = vmatmul.mubr.bf16.gmra.mrb[0].mxu0 %v950
      %v986 = vpop.f32.mrb[0].mxu0
      %v987 = vadd.f32 0.0, %v986
      %v988 = vpop.f32.mrb[0].mxu0
      %v989 = vpop.f32.mrb[0].mxu0
      %v990 = vadd.f32 0.0, %v989
      %v991 = vpop.f32.mrb[0].mxu0
      %992 = vdwg.mxu0
      %v997 = vunpack.c.l.b16 %v340
      %v998 = vunpack.c.l.b16 %v341
      %v999 = vunpack.c.l.b16 %v342
      %v1000 = vunpack.c.l.b16 %v343
      %v1001 = vpack.c.b16 %v998, %v997
      %v1002 = vpack.c.b16 %v1000, %v999
      %v1006 = vsel %vm488, %v936, 0
      %1008 = vmatprep.subr.bf16.mxu0 0
      %1009 = vmatpush1.bf16.msra.mxu0 %v1001
      %1010 = vmatprep.subr.bf16.mxu0 0
      %1011 = vmatpush1.bf16.msra.mxu0 %v1002
      %1012 = vmatprep.subr.bf16.mxu0 0
      %1013 = vmatpush1.bf16.msra.mxu0 0
      %1014 = vmatprep.subr.bf16.mxu0 0
      %1015 = vmatpush1.bf16.msra.mxu0 0
      %1016 = vmatprep.subr.bf16.mxu0 0
      %1017 = vmatpush1.bf16.msra.mxu0 0
      %1018 = vmatprep.subr.bf16.mxu0 0
      %1019 = vmatpush1.bf16.msra.mxu0 0
      %1020 = vmatprep.subr.bf16.mxu0 0
      %1021 = vmatpush1.bf16.msra.mxu0 0
      %1022 = vmatprep.subr.bf16.mxu0 0
      %1023 = vmatpush1.bf16.msra.mxu0 0
      %1024 = vmatprep.subr.bf16.mxu0 0
      %1025 = vmatpush1.bf16.msra.mxu0 0
      %1026 = vmatprep.subr.bf16.mxu0 0
      %1027 = vmatpush1.bf16.msra.mxu0 0
      %1028 = vmatprep.subr.bf16.mxu0 0
      %1029 = vmatpush1.bf16.msra.mxu0 0
      %1030 = vmatprep.subr.bf16.mxu0 0
      %1031 = vmatpush1.bf16.msra.mxu0 0
      %1032 = vmatprep.subr.bf16.mxu0 0
      %1033 = vmatpush1.bf16.msra.mxu0 0
      %1034 = vmatprep.subr.bf16.mxu0 0
      %1035 = vmatpush1.bf16.msra.mxu0 0
      %1036 = vmatprep.subr.bf16.mxu0 0
      %1037 = vmatpush1.bf16.msra.mxu0 0
      %1038 = vmatprep.subr.bf16.mxu0 0
      %1039 = vmatpush1.bf16.msra.mxu0 0
      %1040 = vmatprep.mubr.bf16.mxu0 0
      %1041 = vmatmul.mubr.bf16.gmra.mrb[0].mxu0 %v1006
      %v1042 = vpop.f32.mrb[0].mxu0
      %v1043 = vadd.f32 %v987, %v1042
      %v1044 = vpop.f32.mrb[0].mxu0
      %v1045 = vpop.f32.mrb[0].mxu0
      %v1046 = vadd.f32 %v990, %v1045
      %v1047 = vpop.f32.mrb[0].mxu0
      %1048 = vdwg.mxu0
      %v1049 = vlaneseq
      %v1050 = vshrl.u32 %v1049, 7
      %v1051 = vsub.s32 0, %v1050
      %v1052 = vrot.slane %v358, %v1051
      %v1053 = vadd.f32 %v1043, %v1052
      %v1054 = vadd.f32 %v1046, %v1052
      %v1055 = vmax.f32 %v1053, 0.0
      %v1056 = vmax.f32 %v1054, 0.0
      %v1057 = vpack.c.bf16 %v1056, %v1055
      %v1058 = vlaneseq
      %v1059 = vshrl.u32 %v1058, 7
      %v1060 = vsub.s32 0, %v1059
      %v1061 = vrot.slane %v359, %v1060
      %v1064 = vunpack.c.l.b16 %v348
      %v1065 = vunpack.c.l.b16 %v349
      %v1066 = vpack.c.b16 %v1065, %v1064
      %v1069 = vsel %vm380, %v1057, 0
      %1071 = vmatprep.subr.bf16.mxu0 0
      %1072 = vmatpush1.bf16.msra.mxu0 %v1066
      %1073 = vmatprep.subr.bf16.mxu0 0
      %1074 = vmatpush1.bf16.msra.mxu0 0
      %1075 = vmatprep.subr.bf16.mxu0 0
      %1076 = vmatpush1.bf16.msra.mxu0 0
      %1077 = vmatprep.subr.bf16.mxu0 0
      %1078 = vmatpush1.bf16.msra.mxu0 0
      %1079 = vmatprep.subr.bf16.mxu0 0
      %1080 = vmatpush1.bf16.msra.mxu0 0
      %1081 = vmatprep.subr.bf16.mxu0 0
      %1082 = vmatpush1.bf16.msra.mxu0 0
      %1083 = vmatprep.subr.bf16.mxu0 0
      %1084 = vmatpush1.bf16.msra.mxu0 0
      %1085 = vmatprep.subr.bf16.mxu0 0
      %1086 = vmatpush1.bf16.msra.mxu0 0
      %1087 = vmatprep.subr.bf16.mxu0 0
      %1088 = vmatpush1.bf16.msra.mxu0 0
      %1089 = vmatprep.subr.bf16.mxu0 0
      %1090 = vmatpush1.bf16.msra.mxu0 0
      %1091 = vmatprep.subr.bf16.mxu0 0
      %1092 = vmatpush1.bf16.msra.mxu0 0
      %1093 = vmatprep.subr.bf16.mxu0 0
      %1094 = vmatpush1.bf16.msra.mxu0 0
      %1095 = vmatprep.subr.bf16.mxu0 0
      %1096 = vmatpush1.bf16.msra.mxu0 0
      %1097 = vmatprep.subr.bf16.mxu0 0
      %1098 = vmatpush1.bf16.msra.mxu0 0
      %1099 = vmatprep.subr.bf16.mxu0 0
      %1100 = vmatpush1.bf16.msra.mxu0 0
      %1101 = vmatprep.subr.bf16.mxu0 0
      %1102 = vmatpush1.bf16.msra.mxu0 0
      %1103 = vmatprep.mubr.bf16.mxu0 0
      %1104 = vmatmul.mubr.bf16.gmra.mrb[0].mxu0 %v1069
      %v1105 = vpop.f32.mrb[0].mxu0
      %v1106 = vadd.f32 %v1061, %v1105
      %v1107 = vpop.f32.mrb[0].mxu0
      %v1108 = vpop.f32.mrb[0].mxu0
      %v1109 = vadd.f32 %v1061, %v1108
      %v1110 = vpop.f32.mrb[0].mxu0
      %1111 = vdwg.mxu0
      %vm1112 = vcmp.gt.f32.partialorder %v1106, 0.0
      %vm1113 = vcmp.gt.f32.partialorder %v1109, 0.0
      %v1114 = vmul.f32 %v1106, 0.01
      %v1115 = vmul.f32 %v1109, 0.01
      %v1116 = vsel %vm1112, %v1106, %v1114
      %v1117 = vsel %vm1113, %v1109, %v1115
      %v1118 = vpack.c.bf16 %v1117, %v1116
      %v1120 = vsel %vm380, %v362, 0
      %1122 = vmatprep.subr.bf16.mxu0 0
      %1123 = vmatpush1.bf16.msra.mxu0 %v1118
      %1124 = vmatprep.subr.bf16.mxu0 0
      %1125 = vmatpush1.bf16.msra.mxu0 0
      %1126 = vmatprep.subr.bf16.mxu0 0
      %1127 = vmatpush1.bf16.msra.mxu0 0
      %1128 = vmatprep.subr.bf16.mxu0 0
      %1129 = vmatpush1.bf16.msra.mxu0 0
      %1130 = vmatprep.subr.bf16.mxu0 0
      %1131 = vmatpush1.bf16.msra.mxu0 0
      %1132 = vmatprep.subr.bf16.mxu0 0
      %1133 = vmatpush1.bf16.msra.mxu0 0
      %1134 = vmatprep.subr.bf16.mxu0 0
      %1135 = vmatpush1.bf16.msra.mxu0 0
      %1136 = vmatprep.subr.bf16.mxu0 0
      %1137 = vmatpush1.bf16.msra.mxu0 0
      %1138 = vmatprep.subr.bf16.mxu0 0
      %1139 = vmatpush1.bf16.msra.mxu0 0
      %1140 = vmatprep.subr.bf16.mxu0 0
      %1141 = vmatpush1.bf16.msra.mxu0 0
      %1142 = vmatprep.subr.bf16.mxu0 0
      %1143 = vmatpush1.bf16.msra.mxu0 0
      %1144 = vmatprep.subr.bf16.mxu0 0
      %1145 = vmatpush1.bf16.msra.mxu0 0
      %1146 = vmatprep.subr.bf16.mxu0 0
      %1147 = vmatpush1.bf16.msra.mxu0 0
      %1148 = vmatprep.subr.bf16.mxu0 0
      %1149 = vmatpush1.bf16.msra.mxu0 0
      %1150 = vmatprep.subr.bf16.mxu0 0
      %1151 = vmatpush1.bf16.msra.mxu0 0
      %1152 = vmatprep.subr.bf16.mxu0 0
      %1153 = vmatpush1.bf16.msra.mxu0 0
      %1154 = vmatprep.mubr.bf16.mxu0 0
      %1155 = vmatmul.mubr.bf16.gmra.mrb[0].mxu0 %v1120
      %v1156 = vpop.f32.mrb[0].mxu0
      %v1157 = vadd.f32 0.0, %v1156
      %v1158 = vpop.f32.mrb[0].mxu0
      %v1159 = vpop.f32.mrb[0].mxu0
      %v1160 = vpop.f32.mrb[0].mxu0
      %1161 = vdwg.mxu0
      %v1162 = vpack.c.bf16 %v1157, %v1157
      %v1163 = vlaneseq
      %v1164 = vshrl.u32 %v1163, 7
      %v1165 = vsub.s32 0, %v1164
      %v1166 = vrot.slane %v355, %v1165
      %v1169 = vunpack.c.l.b16 %v338
      %v1170 = vunpack.c.l.b16 %v339
      %v1171 = vpack.c.b16 %v1170, %v1169
      %v1174 = vsel %vm380, %v1162, 0
      %1176 = vmatprep.subr.bf16.mxu0 0
      %1177 = vmatpush1.bf16.msra.mxu0 %v1171
      %1178 = vmatprep.subr.bf16.mxu0 0
      %1179 = vmatpush1.bf16.msra.mxu0 0
      %1180 = vmatprep.subr.bf16.mxu0 0
      %1181 = vmatpush1.bf16.msra.mxu0 0
      %1182 = vmatprep.subr.bf16.mxu0 0
      %1183 = vmatpush1.bf16.msra.mxu0 0
      %1184 = vmatprep.subr.bf16.mxu0 0
      %1185 = vmatpush1.bf16.msra.mxu0 0
      %1186 = vmatprep.subr.bf16.mxu0 0
      %1187 = vmatpush1.bf16.msra.mxu0 0
      %1188 = vmatprep.subr.bf16.mxu0 0
      %1189 = vmatpush1.bf16.msra.mxu0 0
      %1190 = vmatprep.subr.bf16.mxu0 0
      %1191 = vmatpush1.bf16.msra.mxu0 0
      %1192 = vmatprep.subr.bf16.mxu0 0
      %1193 = vmatpush1.bf16.msra.mxu0 0
      %1194 = vmatprep.subr.bf16.mxu0 0
      %1195 = vmatpush1.bf16.msra.mxu0 0
      %1196 = vmatprep.subr.bf16.mxu0 0
      %1197 = vmatpush1.bf16.msra.mxu0 0
      %1198 = vmatprep.subr.bf16.mxu0 0
      %1199 = vmatpush1.bf16.msra.mxu0 0
      %1200 = vmatprep.subr.bf16.mxu0 0
      %1201 = vmatpush1.bf16.msra.mxu0 0
      %1202 = vmatprep.subr.bf16.mxu0 0
      %1203 = vmatpush1.bf16.msra.mxu0 0
      %1204 = vmatprep.subr.bf16.mxu0 0
      %1205 = vmatpush1.bf16.msra.mxu0 0
      %1206 = vmatprep.subr.bf16.mxu0 0
      %1207 = vmatpush1.bf16.msra.mxu0 0
      %1208 = vmatprep.mubr.bf16.mxu0 0
      %1209 = vmatmul.mubr.bf16.gmra.mrb[0].mxu0 %v1174
      %v1210 = vpop.f32.mrb[0].mxu0
      %v1211 = vadd.f32 %v1166, %v1210
      %v1212 = vpop.f32.mrb[0].mxu0
      %v1213 = vpop.f32.mrb[0].mxu0
      %v1214 = vpop.f32.mrb[0].mxu0
      %1215 = vdwg.mxu0
      %vm1216 = vcmp.gt.f32.partialorder %v1211, 0.0
      %v1217 = vmul.f32 %v1211, 0.01
      %v1218 = vsel %vm1216, %v1211, %v1217
      %v1219 = vlaneseq
      %v1220 = vshrl.u32 %v1219, 7
      %v1221 = vsub.s32 0, %v1220
      %v1222 = vrot.slane %v356, %v1221
      %v1223 = vmul.f32 %v1218, %v1222
      %vm1224 = vcmask 254976
      %v1225 = vsel %vm1224, %v1223, 0.0
      %1226 = vadd.xlane.f32.xlu0 %v1225
      %v1227 = vpop.xlane.xlu0 %1226
      %v1228 = vlaneseq
      %v1229 = vshrl.u32 %v1228, 7
      %v1230 = vsub.s32 0, %v1229
      %v1231 = vrot.slane %v357, %v1230
      %v1232 = vadd.f32 %v1227, %v1231
      %v1233 = vmax.f32 %v1232, 0.0
      %vm1234 = vcmask 1024
      %1235 = vst.msk [vmem:[%s310] sm:$0x3] %vm1234, %v1233
      %p1236 = scmp.lt.s32.totalorder %s18, 1
      %s1237 = scalar_select %p1236, %s18, 1
      %s1238 = smul.addr %s1237, 2
      %s1239 = scalar_lea.vmem %s7, %s1238
      // Predicated region
      $region49: #{tpu_custom_call.1} parent=47 // pred_check
        %p1240 = pneg %p198
      $region50: #{tpu_custom_call.1} parent=47 // pred_check_branch
        %1242 = sbr.rel (%p1240) target = $region52
      $region51: #{tpu_custom_call.1} parent=47 // pred_region
        _
      $region52: #{tpu_custom_call.1} parent=47 // pred_fallthru
        _
    $region48: #{tpu_custom_call.1} parent=5 // pred_fallthru
      _
    %p1243 = scmp.le.s32.totalorder 2, %s13
    // Predicated region
    $region53: #{tpu_custom_call.1} parent=5 // pred_check
      %p1244 = pneg %p1243
    $region54: #{tpu_custom_call.1} parent=5 // pred_check_branch
      %1246 = sbr.rel (%p1244) target = $region56
    $region55: #{tpu_custom_call.1} parent=5 // pred_region
      %s1247 = ssub.s32 %s13, 2
      // Predicated region
      $region57: #{tpu_custom_call.1} parent=55 // pred_check
        %p1248 = pneg %p204
      $region58: #{tpu_custom_call.1} parent=55 // pred_check_branch
        %1250 = sbr.rel (%p1248) target = $region60
      $region59: #{tpu_custom_call.1} parent=55 // pred_region
        %p1251 = scmp.lt.s32.totalorder %s19, 1
        %s1252 = scalar_select %p1251, %s19, 1
        %s1253 = smul.addr %s1252, 2
        %s1254 = scalar_lea.vmem %s7, %s1253
      $region60: #{tpu_custom_call.1} parent=55 // pred_fallthru
        _
    $region56: #{tpu_custom_call.1} parent=5 // pred_fallthru
      _
  $region6: #{tpu_custom_call.1} parent=0 // loop_footer
    %s17 = sadd.s32 1, %s13
  $region7: #{tpu_custom_call.1} parent=0 // loop_footer_branch
    %12 = sbr.rel target = $region3
  $region8: #{tpu_custom_call.1} parent=0 // loop_exit
    _

</llo_original>
